<compile_context>
chip_gen: v7x
topology: tpu7x:2x2x1
jax: 0.10.0
libtpu: 0.0.40
codegen_flags: <defaults>
</compile_context>

<pallas_src>
import functools
import math

import jax
import jax.numpy as jnp
from jax.experimental import pallas as pl
from jax.experimental.pallas import tpu as pltpu

EPS = 1e-6


def _layer_norm(v, a, b, eps=EPS):
    """Annotated-transformer LayerNorm: a*(v-mean)/(unbiased_std+eps)+b."""
    d = v.shape[-1]
    mean = jnp.mean(v, axis=-1, keepdims=True)
    centered = v - mean                                   # computed once, reused
    var = jnp.sum(centered * centered, axis=-1, keepdims=True) * (1.0 / (d - 1))
    inv = pl.reciprocal(jnp.sqrt(var) + eps, approx=False)
    return a * (centered * inv) + b


def encoder_layer_kernel(
    x_ref, bias_ref,
    ln1_a_ref, ln1_b_ref,
    wqkv_ref, bqkv_ref, wo_ref, bo_ref,
    ln2_a_ref, ln2_b_ref,
    w1_ref, b1_ref, w2_ref, b2_ref,
    o_ref,
    *, num_heads,
):
    x = x_ref[0]                          # (S, D) f32 — one batch element per grid step
    bias = bias_ref[0]                    # (1, S) f32 additive mask bias (0 / -1e9)
    S, D = x.shape
    H = num_heads
    dk = D // H
    bf16, f32 = jnp.bfloat16, jnp.float32

    # ---------------- Sublayer 0: x + SelfAttn(LN1(x)) ----------------
    xn = _layer_norm(x, ln1_a_ref[...], ln1_b_ref[...])              # (S, D) f32

    # Fused QKV: ONE lane-dense (S, D) @ (D, 3D) MXU matmul (K=D, N=3D).
    # 1/sqrt(dk) is already folded into the q-columns of wqkv / bqkv.
    qkv = jnp.dot(xn.astype(bf16), wqkv_ref[...],
                  preferred_element_type=f32) + bqkv_ref[...]        # (S, 3D) f32

    # Head split: (S, 3D) -> (S, 3H, dk) -> (3H, S, dk) -> (3, H, S, dk).
    qkv = qkv.reshape(S, 3 * H, dk).transpose(1, 0, 2).reshape(3, H, S, dk)
    q = qkv[0].astype(bf16)               # (H, S, dk), scale pre-folded
    k = qkv[1].astype(bf16)
    v = qkv[2].astype(bf16)

    scores = jnp.einsum('hqd,hkd->hqk', q, k, preferred_element_type=f32)  # (H, S, S)
    scores = scores + bias                                 # additive mask bias
    scores = scores - jnp.max(scores, axis=-1, keepdims=True)
    p = jnp.exp(scores)
    p = p * pl.reciprocal(jnp.sum(p, axis=-1, keepdims=True), approx=True)
    ctx = jnp.einsum('hqk,hkd->hqd', p.astype(bf16), v,
                     preferred_element_type=f32)           # (H, S, dk) f32

    # Output projection: merge heads -> (S, D), ONE matmul with K = H*dk = D.
    ctx_sd = ctx.transpose(1, 0, 2).reshape(S, D).astype(bf16)       # concat(heads)
    attn_out = jnp.dot(ctx_sd, wo_ref[...], preferred_element_type=f32)
    y = x + attn_out + bo_ref[...]                         # residual (dropout == identity)

    # ---------------- Sublayer 1: y + FFN(LN2(y)) ----------------
    yn = _layer_norm(y, ln2_a_ref[...], ln2_b_ref[...])
    h1 = jnp.dot(yn.astype(bf16), w1_ref[...], preferred_element_type=f32) + b1_ref[...]
    h1 = jnp.maximum(h1, 0.0)                              # relu
    h2 = jnp.dot(h1.astype(bf16), w2_ref[...], preferred_element_type=f32) + b2_ref[...]

    o_ref[0] = (y + h2).astype(o_ref.dtype)                # residual (dropout == identity)


def encoder_layer(x, mask, params, *, num_heads, out_dtype=jnp.float32):
    """x: (B, S, D) f32, mask: (B, S) f32 (1.0 = attend, 0.0 = masked key)."""
    B, S, D = x.shape
    H = num_heads
    assert D % H == 0
    dk = D // H
    F = params['w1'].shape[1]
    scale = 1.0 / math.sqrt(dk)
    bf16 = jnp.bfloat16

    # ---- pack weights once in the wrapper ----
    # wqkv: (D, 3D) so the kernel does a single lane-dense matmul; the q block
    # gets the 1/sqrt(dk) scale folded in *in f32* before the bf16 cast.
    wqkv = jnp.concatenate(
        [params['wq'] * scale, params['wk'], params['wv']], axis=1).astype(bf16)  # (D, 3D)
    bqkv = jnp.concatenate(
        [params['bq'] * scale, params['bk'], params['bv']], axis=1)               # (1, 3D) f32
    wo = params['wo'].astype(bf16)                                                # (D, D)
    w1 = params['w1'].astype(bf16)                                                # (D, F)
    w2 = params['w2'].astype(bf16)                                                # (F, D)

    # Additive attention-mask bias: 0.0 where attended, -1e9 where masked.
    bias = jnp.where(mask == 0.0, -1e9, 0.0).astype(jnp.float32).reshape(B, 1, S)

    args = (x, bias,
            params['ln1_a'], params['ln1_b'],
            wqkv, bqkv, wo, params['bo'],
            params['ln2_a'], params['ln2_b'],
            w1, params['b1'], w2, params['b2'])

    def resident(a):  # full-array block, constant index_map -> stays in VMEM
        # NOTE(v7x, large models): add pipeline_mode=pl.Buffered(1) here to avoid
        # double-buffering the resident weights inside the 64 MiB VMEM budget.
        return pl.BlockSpec(tuple(a.shape), lambda b, n=a.ndim: (0,) * n)

    in_specs = [
        pl.BlockSpec((1, S, D), lambda b: (b, 0, 0)),      # x: one batch-row block
        pl.BlockSpec((1, 1, S), lambda b: (b, 0, 0)),      # mask bias
    ] + [resident(a) for a in args[2:]]
    out_spec = pl.BlockSpec((1, S, D), lambda b: (b, 0, 0))

    # Advisory cost for XLA scheduling around the custom call.
    flops = B * (2 * S * D * 3 * D          # fused QKV
                 + 4 * H * S * S * dk       # scores + context
                 + 2 * S * D * D            # output projection
                 + 4 * S * D * F)           # feed-forward
    transcendentals = B * (H * S * S + 4 * S)              # exp + LN sqrt/recip
    bytes_accessed = (sum(int(a.size) * a.dtype.itemsize for a in args)
                      + B * S * D * jnp.dtype(out_dtype).itemsize)

    return pl.pallas_call(
        functools.partial(encoder_layer_kernel, num_heads=H),
        grid=(B,),
        in_specs=in_specs,
        out_specs=out_spec,
        out_shape=jax.ShapeDtypeStruct((B, S, D), out_dtype),
        compiler_params=pltpu.CompilerParams(
            dimension_semantics=("parallel",),             # shard batch over TCs on v7x
            vmem_limit_bytes=32 * 1024 * 1024),
        cost_estimate=pl.CostEstimate(
            flops=int(flops),
            transcendentals=int(transcendentals),
            bytes_accessed=int(bytes_accessed)),
    )(*args)


# ----------------------- pure-JAX (f32) reference -----------------------
def encoder_layer_ref(x, mask, params, *, num_heads):
    B, S, D = x.shape
    H = num_heads
    dk = D // H

    def ln(v, a, b, eps=EPS):
        mean = jnp.mean(v, axis=-1, keepdims=True)
        var = jnp.sum((v - mean) ** 2, axis=-1, keepdims=True) / (D - 1)
        return a * (v - mean) / (jnp.sqrt(var) + eps) + b

    xn = ln(x, params['ln1_a'], params['ln1_b'])
    q = xn @ params['wq'] + params['bq']
    k = xn @ params['wk'] + params['bk']
    v = xn @ params['wv'] + params['bv']
    q = q.reshape(B, S, H, dk).transpose(0, 2, 1, 3)
    k = k.reshape(B, S, H, dk).transpose(0, 2, 1, 3)
    v = v.reshape(B, S, H, dk).transpose(0, 2, 1, 3)
    scores = jnp.einsum('bhqd,bhkd->bhqk', q, k) / math.sqrt(dk)
    scores = jnp.where(mask[:, None, None, :] == 0.0, -1e9, scores)
    p = jax.nn.softmax(scores, axis=-1)
    attn = jnp.einsum('bhqk,bhkd->bhqd', p, v).transpose(0, 2, 1, 3).reshape(B, S, D)
    x = x + (attn @ params['wo'] + params['bo'])
    xn2 = ln(x, params['ln2_a'], params['ln2_b'])
    ff = jnp.maximum(xn2 @ params['w1'] + params['b1'], 0.0) @ params['w2'] + params['b2']
    return x + ff


def make_params(key, d_model, d_ff):
    ks = jax.random.split(key, 12)

    def lin(kw, kb, din, dout):
        s = 1.0 / math.sqrt(din)
        return (jax.random.uniform(kw, (din, dout), jnp.float32, -s, s),
                jax.random.uniform(kb, (1, dout), jnp.float32, -s, s))

    wq, bq = lin(ks[0], ks[1], d_model, d_model)
    wk, bk = lin(ks[2], ks[3], d_model, d_model)
    wv, bv = lin(ks[4], ks[5], d_model, d_model)
    wo, bo = lin(ks[6], ks[7], d_model, d_model)
    w1, b1 = lin(ks[8], ks[9], d_model, d_ff)
    w2, b2 = lin(ks[10], ks[11], d_ff, d_model)
    return dict(
        ln1_a=jnp.ones((1, d_model), jnp.float32),
        ln1_b=jnp.zeros((1, d_model), jnp.float32),
        ln2_a=jnp.ones((1, d_model), jnp.float32),
        ln2_b=jnp.zeros((1, d_model), jnp.float32),
        wq=wq, bq=bq, wk=wk, bk=bk, wv=wv, bv=bv, wo=wo, bo=bo,
        w1=w1, b1=b1, w2=w2, b2=b2,
    )


if __name__ == "__main__":
    B, S, D, H, F = 2, 8, 128, 4, 256   # batch, seq, d_model (lane-dense), heads, d_ff
    key = jax.random.PRNGKey(0)
    kx, kp = jax.random.split(key)
    x = jax.random.normal(kx, (B, S, D), jnp.float32)
    # src_mask: batch 0 attends to everything, batch 1 masks the last 2 key positions
    mask = jnp.ones((B, S), jnp.float32).at[1, S - 2:].set(0.0)
    params = make_params(kp, D, F)

    out = jax.block_until_ready(encoder_layer(x, mask, params, num_heads=H))
    ref = encoder_layer_ref(x, mask, params, num_heads=H)

    assert out.shape == (B, S, D)
    # Tolerance loosened because matmul operands are bf16 (MXU-native) and the
    # softmax denominator uses the approximate EUP reciprocal.
    max_err = float(jnp.max(jnp.abs(out - ref)))
    assert max_err < 1e-1, f"mismatch vs reference (max abs err {max_err})"
    print("KERNEL_OK")
</pallas_src>

<mosaic_0001>
module attributes {stable_mosaic.version = 11 : i64} {
  func.func @encoder_layer_kernel(%arg0: i32, %arg1: memref<1x8x128xf32, #tpu.memory_space<vmem>>, %arg2: memref<1x1x8xf32, #tpu.memory_space<vmem>>, %arg3: memref<1x128xf32, #tpu.memory_space<vmem>>, %arg4: memref<1x128xf32, #tpu.memory_space<vmem>>, %arg5: memref<128x384xbf16, #tpu.memory_space<vmem>>, %arg6: memref<1x384xf32, #tpu.memory_space<vmem>>, %arg7: memref<128x128xbf16, #tpu.memory_space<vmem>>, %arg8: memref<1x128xf32, #tpu.memory_space<vmem>>, %arg9: memref<1x128xf32, #tpu.memory_space<vmem>>, %arg10: memref<1x128xf32, #tpu.memory_space<vmem>>, %arg11: memref<128x256xbf16, #tpu.memory_space<vmem>>, %arg12: memref<1x256xf32, #tpu.memory_space<vmem>>, %arg13: memref<256x128xbf16, #tpu.memory_space<vmem>>, %arg14: memref<1x128xf32, #tpu.memory_space<vmem>>, %arg15: memref<1x8x128xf32, #tpu.memory_space<vmem>>) attributes {dimension_semantics = [#tpu.dimension_semantics<parallel>], iteration_bounds = array<i64: 2>, scalar_prefetch = 0 : i64, scratch_operands = 0 : i64, tpu.core_type = #tpu.core_type<tc>, window_params = [{transform_indices = @transform_0, window_bounds = array<i64: 1, 8, 128>}, {transform_indices = @transform_1, window_bounds = array<i64: 1, 1, 8>}, {pipeline_mode = #tpu.pipeline_mode<synchronous>, transform_indices = @transform_2, window_bounds = array<i64: 1, 128>}, {pipeline_mode = #tpu.pipeline_mode<synchronous>, transform_indices = @transform_3, window_bounds = array<i64: 1, 128>}, {pipeline_mode = #tpu.pipeline_mode<synchronous>, transform_indices = @transform_4, window_bounds = array<i64: 128, 384>}, {pipeline_mode = #tpu.pipeline_mode<synchronous>, transform_indices = @transform_5, window_bounds = array<i64: 1, 384>}, {pipeline_mode = #tpu.pipeline_mode<synchronous>, transform_indices = @transform_6, window_bounds = array<i64: 128, 128>}, {pipeline_mode = #tpu.pipeline_mode<synchronous>, transform_indices = @transform_7, window_bounds = array<i64: 1, 128>}, {pipeline_mode = #tpu.pipeline_mode<synchronous>, transform_indices = @transform_8, window_bounds = array<i64: 1, 128>}, {pipeline_mode = #tpu.pipeline_mode<synchronous>, transform_indices = @transform_9, window_bounds = array<i64: 1, 128>}, {pipeline_mode = #tpu.pipeline_mode<synchronous>, transform_indices = @transform_10, window_bounds = array<i64: 128, 256>}, {pipeline_mode = #tpu.pipeline_mode<synchronous>, transform_indices = @transform_11, window_bounds = array<i64: 1, 256>}, {pipeline_mode = #tpu.pipeline_mode<synchronous>, transform_indices = @transform_12, window_bounds = array<i64: 256, 128>}, {pipeline_mode = #tpu.pipeline_mode<synchronous>, transform_indices = @transform_13, window_bounds = array<i64: 1, 128>}, {transform_indices = @transform_14, window_bounds = array<i64: 1, 8, 128>}]} {
    %c0 = arith.constant 0 : index
    %c0_0 = arith.constant 0 : index
    %c0_1 = arith.constant 0 : index
    %0 = vector.load %arg1[%c0, %c0_0, %c0_1] : memref<1x8x128xf32, #tpu.memory_space<vmem>>, vector<1x8x128xf32>
    %1 = vector.shape_cast %0 : vector<1x8x128xf32> to vector<8x128xf32>
    %c0_2 = arith.constant 0 : index
    %c0_3 = arith.constant 0 : index
    %c0_4 = arith.constant 0 : index
    %2 = vector.load %arg2[%c0_2, %c0_3, %c0_4] : memref<1x1x8xf32, #tpu.memory_space<vmem>>, vector<1x1x8xf32>
    %3 = vector.shape_cast %2 : vector<1x1x8xf32> to vector<1x8xf32>
    %c0_5 = arith.constant 0 : index
    %c0_6 = arith.constant 0 : index
    %4 = vector.load %arg3[%c0_5, %c0_6] : memref<1x128xf32, #tpu.memory_space<vmem>>, vector<1x128xf32>
    %c0_7 = arith.constant 0 : index
    %c0_8 = arith.constant 0 : index
    %5 = vector.load %arg4[%c0_7, %c0_8] : memref<1x128xf32, #tpu.memory_space<vmem>>, vector<1x128xf32>
    %cst = arith.constant dense<0.000000e+00> : vector<8xf32>
    %6 = vector.multi_reduction <add>, %1, %cst [1] : vector<8x128xf32> to vector<8xf32>
    %7 = vector.shape_cast %6 : vector<8xf32> to vector<8x1xf32>
    %cst_9 = arith.constant 1.280000e+02 : f32
    %8 = vector.broadcast %cst_9 : f32 to vector<8x1xf32>
    %9 = arith.divf %7, %8 : vector<8x1xf32>
    %10 = vector.broadcast %9 : vector<8x1xf32> to vector<8x128xf32>
    %11 = arith.subf %1, %10 : vector<8x128xf32>
    %12 = arith.mulf %11, %11 : vector<8x128xf32>
    %cst_10 = arith.constant dense<0.000000e+00> : vector<8xf32>
    %13 = vector.multi_reduction <add>, %12, %cst_10 [1] : vector<8x128xf32> to vector<8xf32>
    %14 = vector.shape_cast %13 : vector<8xf32> to vector<8x1xf32>
    %cst_11 = arith.constant 0.00787401571 : f32
    %15 = vector.broadcast %cst_11 : f32 to vector<8x1xf32>
    %16 = arith.mulf %14, %15 : vector<8x1xf32>
    %17 = math.sqrt %16 : vector<8x1xf32>
    %cst_12 = arith.constant 9.99999997E-7 : f32
    %18 = vector.broadcast %cst_12 : f32 to vector<8x1xf32>
    %19 = arith.addf %17, %18 : vector<8x1xf32>
    %20 = tpu.reciprocal %19 : vector<8x1xf32> -> vector<8x1xf32>
    %21 = vector.broadcast %20 : vector<8x1xf32> to vector<8x128xf32>
    %22 = arith.mulf %11, %21 : vector<8x128xf32>
    %23 = vector.broadcast %4 : vector<1x128xf32> to vector<8x128xf32>
    %24 = arith.mulf %23, %22 : vector<8x128xf32>
    %25 = vector.broadcast %5 : vector<1x128xf32> to vector<8x128xf32>
    %26 = arith.addf %24, %25 : vector<8x128xf32>
    %27 = arith.truncf %26 : vector<8x128xf32> to vector<8x128xbf16>
    %c0_13 = arith.constant 0 : index
    %c0_14 = arith.constant 0 : index
    %28 = vector.load %arg5[%c0_13, %c0_14] : memref<128x384xbf16, #tpu.memory_space<vmem>>, vector<128x384xbf16>
    %cst_15 = arith.constant dense<0.000000e+00> : vector<8x384xf32>
    %29 = tpu.matmul %27, %28, %cst_15 {dimension_numbers = #tpu.dot_dimension_numbers<[1], [0], [0], [1], [0, 0, 1, 1], [], []>} : vector<8x128xbf16>, vector<128x384xbf16>, vector<8x384xf32> -> vector<8x384xf32>
    %c0_16 = arith.constant 0 : index
    %c0_17 = arith.constant 0 : index
    %30 = vector.load %arg6[%c0_16, %c0_17] : memref<1x384xf32, #tpu.memory_space<vmem>>, vector<1x384xf32>
    %31 = vector.broadcast %30 : vector<1x384xf32> to vector<8x384xf32>
    %32 = arith.addf %29, %31 : vector<8x384xf32>
    %33 = vector.shape_cast %32 : vector<8x384xf32> to vector<8x12x32xf32>
    %34 = tpu.transpose %33, [1, 0, 2] : vector<8x12x32xf32> -> vector<12x8x32xf32>
    %35 = vector.shape_cast %34 : vector<12x8x32xf32> to vector<3x4x8x32xf32>
    %36 = vector.extract_strided_slice %35 {offsets = [0, 0, 0, 0], sizes = [1, 4, 8, 32], strides = [1, 1, 1, 1]} : vector<3x4x8x32xf32> to vector<1x4x8x32xf32>
    %37 = vector.shape_cast %36 : vector<1x4x8x32xf32> to vector<4x8x32xf32>
    %38 = arith.truncf %37 : vector<4x8x32xf32> to vector<4x8x32xbf16>
    %39 = vector.extract_strided_slice %35 {offsets = [1, 0, 0, 0], sizes = [1, 4, 8, 32], strides = [1, 1, 1, 1]} : vector<3x4x8x32xf32> to vector<1x4x8x32xf32>
    %40 = vector.shape_cast %39 : vector<1x4x8x32xf32> to vector<4x8x32xf32>
    %41 = arith.truncf %40 : vector<4x8x32xf32> to vector<4x8x32xbf16>
    %42 = vector.extract_strided_slice %35 {offsets = [2, 0, 0, 0], sizes = [1, 4, 8, 32], strides = [1, 1, 1, 1]} : vector<3x4x8x32xf32> to vector<1x4x8x32xf32>
    %43 = vector.shape_cast %42 : vector<1x4x8x32xf32> to vector<4x8x32xf32>
    %44 = arith.truncf %43 : vector<4x8x32xf32> to vector<4x8x32xbf16>
    "tpu.trace_start"() <{level = 10 : i32, message = "hqd,hkd->hqk"}> : () -> ()
    %cst_18 = arith.constant dense<0.000000e+00> : vector<4x8x8xf32>
    %45 = tpu.matmul %38, %41, %cst_18 {dimension_numbers = #tpu.dot_dimension_numbers<[2], [2], [1], [1], [0, 0, 0, 1, 1, 1], [0], [0]>} : vector<4x8x32xbf16>, vector<4x8x32xbf16>, vector<4x8x8xf32> -> vector<4x8x8xf32>
    "tpu.trace_stop"() : () -> ()
    %46 = vector.shape_cast %3 : vector<1x8xf32> to vector<1x1x8xf32>
    %47 = vector.broadcast %46 : vector<1x1x8xf32> to vector<4x8x8xf32>
    %48 = arith.addf %45, %47 : vector<4x8x8xf32>
    %cst_19 = arith.constant dense<0xFF800000> : vector<4x8xf32>
    %49 = vector.multi_reduction <maximumf>, %48, %cst_19 [2] : vector<4x8x8xf32> to vector<4x8xf32>
    %50 = vector.shape_cast %49 : vector<4x8xf32> to vector<4x8x1xf32>
    %51 = vector.broadcast %50 : vector<4x8x1xf32> to vector<4x8x8xf32>
    %52 = arith.subf %48, %51 : vector<4x8x8xf32>
    %53 = math.exp %52 : vector<4x8x8xf32>
    %cst_20 = arith.constant dense<0.000000e+00> : vector<4x8xf32>
    %54 = vector.multi_reduction <add>, %53, %cst_20 [2] : vector<4x8x8xf32> to vector<4x8xf32>
    %55 = vector.shape_cast %54 : vector<4x8xf32> to vector<4x8x1xf32>
    %56 = tpu.reciprocal %55 {approx = true} : vector<4x8x1xf32> -> vector<4x8x1xf32>
    %57 = vector.broadcast %56 : vector<4x8x1xf32> to vector<4x8x8xf32>
    %58 = arith.mulf %53, %57 : vector<4x8x8xf32>
    %59 = arith.truncf %58 : vector<4x8x8xf32> to vector<4x8x8xbf16>
    "tpu.trace_start"() <{level = 10 : i32, message = "hqk,hkd->hqd"}> : () -> ()
    %cst_21 = arith.constant dense<0.000000e+00> : vector<4x8x32xf32>
    %60 = tpu.matmul %59, %44, %cst_21 {dimension_numbers = #tpu.dot_dimension_numbers<[2], [1], [1], [2], [0, 0, 0, 1, 1, 2], [0], [0]>} : vector<4x8x8xbf16>, vector<4x8x32xbf16>, vector<4x8x32xf32> -> vector<4x8x32xf32>
    "tpu.trace_stop"() : () -> ()
    %61 = tpu.transpose %60, [1, 0, 2] : vector<4x8x32xf32> -> vector<8x4x32xf32>
    %62 = vector.shape_cast %61 : vector<8x4x32xf32> to vector<8x128xf32>
    %63 = arith.truncf %62 : vector<8x128xf32> to vector<8x128xbf16>
    %c0_22 = arith.constant 0 : index
    %c0_23 = arith.constant 0 : index
    %64 = vector.load %arg7[%c0_22, %c0_23] : memref<128x128xbf16, #tpu.memory_space<vmem>>, vector<128x128xbf16>
    %cst_24 = arith.constant dense<0.000000e+00> : vector<8x128xf32>
    %65 = tpu.matmul %63, %64, %cst_24 {dimension_numbers = #tpu.dot_dimension_numbers<[1], [0], [0], [1], [0, 0, 1, 1], [], []>} : vector<8x128xbf16>, vector<128x128xbf16>, vector<8x128xf32> -> vector<8x128xf32>
    %66 = arith.addf %1, %65 : vector<8x128xf32>
    %c0_25 = arith.constant 0 : index
    %c0_26 = arith.constant 0 : index
    %67 = vector.load %arg8[%c0_25, %c0_26] : memref<1x128xf32, #tpu.memory_space<vmem>>, vector<1x128xf32>
    %68 = vector.broadcast %67 : vector<1x128xf32> to vector<8x128xf32>
    %69 = arith.addf %66, %68 : vector<8x128xf32>
    %c0_27 = arith.constant 0 : index
    %c0_28 = arith.constant 0 : index
    %70 = vector.load %arg9[%c0_27, %c0_28] : memref<1x128xf32, #tpu.memory_space<vmem>>, vector<1x128xf32>
    %c0_29 = arith.constant 0 : index
    %c0_30 = arith.constant 0 : index
    %71 = vector.load %arg10[%c0_29, %c0_30] : memref<1x128xf32, #tpu.memory_space<vmem>>, vector<1x128xf32>
    %cst_31 = arith.constant dense<0.000000e+00> : vector<8xf32>
    %72 = vector.multi_reduction <add>, %69, %cst_31 [1] : vector<8x128xf32> to vector<8xf32>
    %73 = vector.shape_cast %72 : vector<8xf32> to vector<8x1xf32>
    %cst_32 = arith.constant 1.280000e+02 : f32
    %74 = vector.broadcast %cst_32 : f32 to vector<8x1xf32>
    %75 = arith.divf %73, %74 : vector<8x1xf32>
    %76 = vector.broadcast %75 : vector<8x1xf32> to vector<8x128xf32>
    %77 = arith.subf %69, %76 : vector<8x128xf32>
    %78 = arith.mulf %77, %77 : vector<8x128xf32>
    %cst_33 = arith.constant dense<0.000000e+00> : vector<8xf32>
    %79 = vector.multi_reduction <add>, %78, %cst_33 [1] : vector<8x128xf32> to vector<8xf32>
    %80 = vector.shape_cast %79 : vector<8xf32> to vector<8x1xf32>
    %cst_34 = arith.constant 0.00787401571 : f32
    %81 = vector.broadcast %cst_34 : f32 to vector<8x1xf32>
    %82 = arith.mulf %80, %81 : vector<8x1xf32>
    %83 = math.sqrt %82 : vector<8x1xf32>
    %cst_35 = arith.constant 9.99999997E-7 : f32
    %84 = vector.broadcast %cst_35 : f32 to vector<8x1xf32>
    %85 = arith.addf %83, %84 : vector<8x1xf32>
    %86 = tpu.reciprocal %85 : vector<8x1xf32> -> vector<8x1xf32>
    %87 = vector.broadcast %86 : vector<8x1xf32> to vector<8x128xf32>
    %88 = arith.mulf %77, %87 : vector<8x128xf32>
    %89 = vector.broadcast %70 : vector<1x128xf32> to vector<8x128xf32>
    %90 = arith.mulf %89, %88 : vector<8x128xf32>
    %91 = vector.broadcast %71 : vector<1x128xf32> to vector<8x128xf32>
    %92 = arith.addf %90, %91 : vector<8x128xf32>
    %93 = arith.truncf %92 : vector<8x128xf32> to vector<8x128xbf16>
    %c0_36 = arith.constant 0 : index
    %c0_37 = arith.constant 0 : index
    %94 = vector.load %arg11[%c0_36, %c0_37] : memref<128x256xbf16, #tpu.memory_space<vmem>>, vector<128x256xbf16>
    %cst_38 = arith.constant dense<0.000000e+00> : vector<8x256xf32>
    %95 = tpu.matmul %93, %94, %cst_38 {dimension_numbers = #tpu.dot_dimension_numbers<[1], [0], [0], [1], [0, 0, 1, 1], [], []>} : vector<8x128xbf16>, vector<128x256xbf16>, vector<8x256xf32> -> vector<8x256xf32>
    %c0_39 = arith.constant 0 : index
    %c0_40 = arith.constant 0 : index
    %96 = vector.load %arg12[%c0_39, %c0_40] : memref<1x256xf32, #tpu.memory_space<vmem>>, vector<1x256xf32>
    %97 = vector.broadcast %96 : vector<1x256xf32> to vector<8x256xf32>
    %98 = arith.addf %95, %97 : vector<8x256xf32>
    %cst_41 = arith.constant 0.000000e+00 : f32
    %99 = vector.broadcast %cst_41 : f32 to vector<8x256xf32>
    %100 = arith.maximumf %98, %99 : vector<8x256xf32>
    %101 = arith.truncf %100 : vector<8x256xf32> to vector<8x256xbf16>
    %c0_42 = arith.constant 0 : index
    %c0_43 = arith.constant 0 : index
    %102 = vector.load %arg13[%c0_42, %c0_43] : memref<256x128xbf16, #tpu.memory_space<vmem>>, vector<256x128xbf16>
    %cst_44 = arith.constant dense<0.000000e+00> : vector<8x128xf32>
    %103 = tpu.matmul %101, %102, %cst_44 {dimension_numbers = #tpu.dot_dimension_numbers<[1], [0], [0], [1], [0, 0, 1, 1], [], []>} : vector<8x256xbf16>, vector<256x128xbf16>, vector<8x128xf32> -> vector<8x128xf32>
    %c0_45 = arith.constant 0 : index
    %c0_46 = arith.constant 0 : index
    %104 = vector.load %arg14[%c0_45, %c0_46] : memref<1x128xf32, #tpu.memory_space<vmem>>, vector<1x128xf32>
    %105 = vector.broadcast %104 : vector<1x128xf32> to vector<8x128xf32>
    %106 = arith.addf %103, %105 : vector<8x128xf32>
    %107 = arith.addf %69, %106 : vector<8x128xf32>
    %c0_47 = arith.constant 0 : index
    %c0_48 = arith.constant 0 : index
    %c0_49 = arith.constant 0 : index
    %108 = vector.load %arg15[%c0_47, %c0_48, %c0_49] : memref<1x8x128xf32, #tpu.memory_space<vmem>>, vector<1x8x128xf32>
    %109 = vector.shape_cast %108 : vector<1x8x128xf32> to vector<8x128xf32>
    %110 = vector.shape_cast %107 : vector<8x128xf32> to vector<1x8x128xf32>
    tpu.vector_store %arg15[%c0_47, %c0_48, %c0_49], %110 {strides = array<i32>} : memref<1x8x128xf32, #tpu.memory_space<vmem>>, vector<1x8x128xf32>,
    return
  }
  func.func @transform_0(%arg0: i32) -> (i32, i32, i32) {
    %c0_i32 = arith.constant 0 : i32
    %c0_i32_0 = arith.constant 0 : i32
    %c0_i32_1 = arith.constant 0 : i32
    return %arg0, %c0_i32, %c0_i32_0 : i32, i32, i32
  }
  func.func @transform_1(%arg0: i32) -> (i32, i32, i32) {
    %c0_i32 = arith.constant 0 : i32
    %c0_i32_0 = arith.constant 0 : i32
    %c0_i32_1 = arith.constant 0 : i32
    return %arg0, %c0_i32, %c0_i32_0 : i32, i32, i32
  }
  func.func @transform_2(%arg0: i32) -> (i32, i32) {
    %c0_i32 = arith.constant 0 : i32
    %c0_i32_0 = arith.constant 0 : i32
    %c0_i32_1 = arith.constant 0 : i32
    return %c0_i32, %c0_i32_0 : i32, i32
  }
  func.func @transform_3(%arg0: i32) -> (i32, i32) {
    %c0_i32 = arith.constant 0 : i32
    %c0_i32_0 = arith.constant 0 : i32
    %c0_i32_1 = arith.constant 0 : i32
    return %c0_i32, %c0_i32_0 : i32, i32
  }
  func.func @transform_4(%arg0: i32) -> (i32, i32) {
    %c0_i32 = arith.constant 0 : i32
    %c0_i32_0 = arith.constant 0 : i32
    %c0_i32_1 = arith.constant 0 : i32
    return %c0_i32, %c0_i32_0 : i32, i32
  }
  func.func @transform_5(%arg0: i32) -> (i32, i32) {
    %c0_i32 = arith.constant 0 : i32
    %c0_i32_0 = arith.constant 0 : i32
    %c0_i32_1 = arith.constant 0 : i32
    return %c0_i32, %c0_i32_0 : i32, i32
  }
  func.func @transform_6(%arg0: i32) -> (i32, i32) {
    %c0_i32 = arith.constant 0 : i32
    %c0_i32_0 = arith.constant 0 : i32
    %c0_i32_1 = arith.constant 0 : i32
    return %c0_i32, %c0_i32_0 : i32, i32
  }
  func.func @transform_7(%arg0: i32) -> (i32, i32) {
    %c0_i32 = arith.constant 0 : i32
    %c0_i32_0 = arith.constant 0 : i32
    %c0_i32_1 = arith.constant 0 : i32
    return %c0_i32, %c0_i32_0 : i32, i32
  }
  func.func @transform_8(%arg0: i32) -> (i32, i32) {
    %c0_i32 = arith.constant 0 : i32
    %c0_i32_0 = arith.constant 0 : i32
    %c0_i32_1 = arith.constant 0 : i32
    return %c0_i32, %c0_i32_0 : i32, i32
  }
  func.func @transform_9(%arg0: i32) -> (i32, i32) {
    %c0_i32 = arith.constant 0 : i32
    %c0_i32_0 = arith.constant 0 : i32
    %c0_i32_1 = arith.constant 0 : i32
    return %c0_i32, %c0_i32_0 : i32, i32
  }
  func.func @transform_10(%arg0: i32) -> (i32, i32) {
    %c0_i32 = arith.constant 0 : i32
    %c0_i32_0 = arith.constant 0 : i32
    %c0_i32_1 = arith.constant 0 : i32
    return %c0_i32, %c0_i32_0 : i32, i32
  }
  func.func @transform_11(%arg0: i32) -> (i32, i32) {
    %c0_i32 = arith.constant 0 : i32
    %c0_i32_0 = arith.constant 0 : i32
    %c0_i32_1 = arith.constant 0 : i32
    return %c0_i32, %c0_i32_0 : i32, i32
  }
  func.func @transform_12(%arg0: i32) -> (i32, i32) {
    %c0_i32 = arith.constant 0 : i32
    %c0_i32_0 = arith.constant 0 : i32
    %c0_i32_1 = arith.constant 0 : i32
    return %c0_i32, %c0_i32_0 : i32, i32
  }
  func.func @transform_13(%arg0: i32) -> (i32, i32) {
    %c0_i32 = arith.constant 0 : i32
    %c0_i32_0 = arith.constant 0 : i32
    %c0_i32_1 = arith.constant 0 : i32
    return %c0_i32, %c0_i32_0 : i32, i32
  }
  func.func @transform_14(%arg0: i32) -> (i32, i32, i32) {
    %c0_i32 = arith.constant 0 : i32
    %c0_i32_0 = arith.constant 0 : i32
    %c0_i32_1 = arith.constant 0 : i32
    return %arg0, %c0_i32, %c0_i32_0 : i32, i32, i32
  }
}

</mosaic_0001>

<llo_original>
// kernel: tpu_custom_call.1
$region0: #{tpu_custom_call.1}
  #allocation0 [shape = 'u32[]', space=smem, size = 0x4, offset = 0x4, fixed_abs, tag = 'smem constant byte address 0x4 - core index']
  #allocation1 [shape = 'u32[144,128]{1,0:T(1,128)}', space=vmem, size = 0x12000, scoped, tag = 'internal scratch']
  %s0 = inlined_call_operand.hbm [shape: f32[2,8,128], index: 0, kind: input, shape index: {}]
  %s1 = inlined_call_operand.vmem [shape: f32[2,1,8], index: 1, kind: input, shape index: {}]
  %s2 = inlined_call_operand.hbm [shape: f32[1,128], index: 2, kind: input, shape index: {}]
  %s3 = inlined_call_operand.vmem [shape: f32[1,128], index: 3, kind: input, shape index: {}]
  %s4 = inlined_call_operand.hbm [shape: bf16[128,384], index: 4, kind: input, shape index: {}]
  %s5 = inlined_call_operand.vmem [shape: f32[1,384], index: 5, kind: input, shape index: {}]
  %s6 = inlined_call_operand.hbm [shape: bf16[128,128], index: 6, kind: input, shape index: {}]
  %s7 = inlined_call_operand.vmem [shape: f32[1,128], index: 7, kind: input, shape index: {}]
  %s8 = inlined_call_operand.vmem [shape: f32[1,128], index: 8, kind: input, shape index: {}]
  %s9 = inlined_call_operand.vmem [shape: f32[1,128], index: 9, kind: input, shape index: {}]
  %s10 = inlined_call_operand.hbm [shape: bf16[128,256], index: 10, kind: input, shape index: {}]
  %s11 = inlined_call_operand.vmem [shape: f32[1,256], index: 11, kind: input, shape index: {}]
  %s12 = inlined_call_operand.hbm [shape: bf16[256,128], index: 12, kind: input, shape index: {}]
  %s13 = inlined_call_operand.vmem [shape: f32[1,128], index: 13, kind: input, shape index: {}]
  %s14 = inlined_call_operand.hbm [shape: f32[2,8,128], index: 14, kind: output, shape index: {}]
  %s15 = sld [smem:[#allocation0]]
  $region113: #{tpu_custom_call.1} parent=0
    _
  %s17 = ssub.s32 1, %s15
  %s18 = scalar_select 0, %s17, %s15
  $region1: #{tpu_custom_call.1} parent=0
    #allocation2 [shape = 'u8[8192]{0}', space=vmem, size = 0x2000, scoped, tag = 'input window, operand 0']
    #allocation3 [shape = 's32[2]{0}', space=sflag, size = 0x8, scoped, tag = 'scoped memory for tpu_custom_call.1']
    #allocation4 [shape = 's32[2]{0}', space=sflag, size = 0x8, scoped, tag = 'scoped memory for tpu_custom_call.1']
    #allocation5 [shape = 'u8[512]{0}', space=vmem, size = 0x400, scoped, tag = 'input window, operand 2, single buffered']
    #allocation6 [shape = 's32[1]{0}', space=sflag, size = 0x4, scoped, tag = 'scoped memory for tpu_custom_call.1']
    #allocation7 [shape = 'u8[98304]{0}', space=vmem, size = 0x18000, scoped, tag = 'input window, operand 4, single buffered']
    #allocation8 [shape = 'u8[32768]{0}', space=vmem, size = 0x8000, scoped, tag = 'input window, operand 6, single buffered']
    #allocation9 [shape = 's32[1]{0}', space=sflag, size = 0x4, scoped, tag = 'scoped memory for tpu_custom_call.1']
    #allocation10 [shape = 'u8[65536]{0}', space=vmem, size = 0x10000, scoped, tag = 'input window, operand 10, single buffered']
    #allocation11 [shape = 'u8[65536]{0}', space=vmem, size = 0x10000, scoped, tag = 'input window, operand 12, single buffered']
    #allocation12 [shape = 's32[1]{0}', space=sflag, size = 0x4, scoped, tag = 'scoped memory for tpu_custom_call.1']
    #allocation13 [shape = 'u8[8192]{0}', space=vmem, size = 0x2000, scoped, tag = 'output window, operand 0']
    %19 = vsyncpa [#allocation3], 0
    %s20 = scalar_lea.sflag [#allocation3], 1
    %21 = vsyncpa %s20, 0
    %22 = vsyncpa [#allocation6], 0
    %23 = vsyncpa [#allocation9], 0
    %24 = vsyncpa [#allocation12], 0
    %25 = vsyncpa [#allocation4], 0
    %s26 = scalar_lea.sflag [#allocation4], 1
    %27 = vsyncpa %s26, 0
    loop: start=0, step=1, limit=4
    $region2: #{tpu_custom_call.1} parent=1 // loop_pre_header
      _
    $region3: #{tpu_custom_call.1} parent=1 // loop_header
      %s29 = sphi 0, %s33
      %p30 = scmp.ge.s32.totalorder %s29, 4
      %s39 = sphi 0, %s41
      %s42 = sphi 0, %s39
      %s43 = sphi 0, %s42
      %s59 = sphi 0, %s43
      %s65 = sphi 0, %s67
      %s68 = sphi 0, %s65
      %s69 = sphi 0, %s68
      %s85 = sphi 0, %s69
      %s89 = sphi 0, %s89
      %s91 = sphi 0, %s89
      %s92 = sphi 0, %s91
      %s106 = sphi 0, %s92
      %s110 = sphi 0, %s110
      %s112 = sphi 0, %s110
      %s113 = sphi 0, %s112
      %s127 = sphi 0, %s113
      %s131 = sphi 0, %s131
      %s133 = sphi 0, %s131
      %s134 = sphi 0, %s133
      %s148 = sphi 0, %s134
      %s152 = sphi 0, %s152
      %s154 = sphi 0, %s152
      %s155 = sphi 0, %s154
      %s169 = sphi 0, %s155
      %s173 = sphi 0, %s173
      %s175 = sphi 0, %s173
      %s176 = sphi 0, %s175
      %s190 = sphi 0, %s176
      %s194 = sphi 0, %s194
      %s196 = sphi 0, %s194
      %s197 = sphi 0, %s196
      %s211 = sphi 0, %s197
      %s215 = sphi 0, %s215
      %s217 = sphi 0, %s215
      %s218 = sphi 0, %s217
      %s232 = sphi 0, %s218
      %s236 = sphi 0, %s236
      %s238 = sphi 0, %s236
      %s239 = sphi 0, %s238
      %s253 = sphi 0, %s239
      %s257 = sphi 0, %s257
      %s259 = sphi 0, %s257
      %s260 = sphi 0, %s259
      %s274 = sphi 0, %s260
      %s278 = sphi 0, %s278
      %s280 = sphi 0, %s278
      %s281 = sphi 0, %s280
      %s295 = sphi 0, %s281
      %s299 = sphi 0, %s299
      %s301 = sphi 0, %s299
      %s302 = sphi 0, %s301
      %s316 = sphi 0, %s302
      %s320 = sphi 0, %s320
      %s322 = sphi 0, %s320
      %s323 = sphi 0, %s322
      %s337 = sphi 0, %s323
      %s343 = sphi 0, %s345
      %s346 = sphi 0, %s343
      %s347 = sphi 0, %s346
      %s363 = sphi 0, %s347
    $region4: #{tpu_custom_call.1} parent=1 // loop_header_branch
      %32 = sbr.rel (%p30) target = $region8
    $region5: #{tpu_custom_call.1} parent=1 // loop_body
      %s34 = ssub.s32 %s29, 1
      %s35 = ssub.s32 %s29, 2
      %s36 = sadd.s32 %s29, 1
      %s37 = ssub.s32 %s29, %s36
      %p38 = scmp.eq.s32.totalorder %s37, 0
      %s40 = sadd.s32 %s39, 1
      %s41 = scalar_select %p38, %s39, %s40
      %p44 = pneg %p38
      %p45 = scmp.eq.s32.totalorder %s29, 1
      %p46 = por %p44, %p45
      %p47 = scmp.ne.s32.totalorder %s39, %s42
      %p48 = scmp.eq.s32.totalorder %s29, 0
      %p49 = por %p47, %p48
      %p50 = scmp.ne.s32.totalorder %s39, %s42
      %p51 = scmp.eq.s32.totalorder %s34, 1
      %p52 = por %p50, %p51
      %p53 = scmp.ne.s32.totalorder %s42, %s43
      %p54 = scmp.eq.s32.totalorder %s34, 0
      %p55 = por %p53, %p54
      %p56 = scmp.ne.s32.totalorder %s42, %s43
      %p57 = scmp.eq.s32.totalorder %s35, 1
      %p58 = por %p56, %p57
      %p60 = scmp.ne.s32.totalorder %s43, %s59
      %p61 = scmp.eq.s32.totalorder %s35, 0
      %p62 = por %p60, %p61
      %s63 = ssub.s32 %s29, %s36
      %p64 = scmp.eq.s32.totalorder %s63, 0
      %s66 = sadd.s32 %s65, 1
      %s67 = scalar_select %p64, %s65, %s66
      %p70 = pneg %p64
      %p71 = scmp.eq.s32.totalorder %s29, 1
      %p72 = por %p70, %p71
      %p73 = scmp.ne.s32.totalorder %s65, %s68
      %p74 = scmp.eq.s32.totalorder %s29, 0
      %p75 = por %p73, %p74
      %p76 = scmp.ne.s32.totalorder %s65, %s68
      %p77 = scmp.eq.s32.totalorder %s34, 1
      %p78 = por %p76, %p77
      %p79 = scmp.ne.s32.totalorder %s68, %s69
      %p80 = scmp.eq.s32.totalorder %s34, 0
      %p81 = por %p79, %p80
      %p82 = scmp.ne.s32.totalorder %s68, %s69
      %p83 = scmp.eq.s32.totalorder %s35, 1
      %p84 = por %p82, %p83
      %p86 = scmp.ne.s32.totalorder %s69, %s85
      %p87 = scmp.eq.s32.totalorder %s35, 0
      %p88 = por %p86, %p87
      %s90 = sadd.s32 %s89, 1
      %p93 = scmp.eq.s32.totalorder %s29, 1
      %p94 = scmp.ne.s32.totalorder %s89, %s91
      %p95 = scmp.eq.s32.totalorder %s29, 0
      %p96 = por %p94, %p95
      %p97 = scmp.ne.s32.totalorder %s89, %s91
      %p98 = scmp.eq.s32.totalorder %s34, 1
      %p99 = por %p97, %p98
      %p100 = scmp.ne.s32.totalorder %s91, %s92
      %p101 = scmp.eq.s32.totalorder %s34, 0
      %p102 = por %p100, %p101
      %p103 = scmp.ne.s32.totalorder %s91, %s92
      %p104 = scmp.eq.s32.totalorder %s35, 1
      %p105 = por %p103, %p104
      %p107 = scmp.ne.s32.totalorder %s92, %s106
      %p108 = scmp.eq.s32.totalorder %s35, 0
      %p109 = por %p107, %p108
      %s111 = sadd.s32 %s110, 1
      %p114 = scmp.eq.s32.totalorder %s29, 1
      %p115 = scmp.ne.s32.totalorder %s110, %s112
      %p116 = scmp.eq.s32.totalorder %s29, 0
      %p117 = por %p115, %p116
      %p118 = scmp.ne.s32.totalorder %s110, %s112
      %p119 = scmp.eq.s32.totalorder %s34, 1
      %p120 = por %p118, %p119
      %p121 = scmp.ne.s32.totalorder %s112, %s113
      %p122 = scmp.eq.s32.totalorder %s34, 0
      %p123 = por %p121, %p122
      %p124 = scmp.ne.s32.totalorder %s112, %s113
      %p125 = scmp.eq.s32.totalorder %s35, 1
      %p126 = por %p124, %p125
      %p128 = scmp.ne.s32.totalorder %s113, %s127
      %p129 = scmp.eq.s32.totalorder %s35, 0
      %p130 = por %p128, %p129
      %s132 = sadd.s32 %s131, 1
      %p135 = scmp.eq.s32.totalorder %s29, 1
      %p136 = scmp.ne.s32.totalorder %s131, %s133
      %p137 = scmp.eq.s32.totalorder %s29, 0
      %p138 = por %p136, %p137
      %p139 = scmp.ne.s32.totalorder %s131, %s133
      %p140 = scmp.eq.s32.totalorder %s34, 1
      %p141 = por %p139, %p140
      %p142 = scmp.ne.s32.totalorder %s133, %s134
      %p143 = scmp.eq.s32.totalorder %s34, 0
      %p144 = por %p142, %p143
      %p145 = scmp.ne.s32.totalorder %s133, %s134
      %p146 = scmp.eq.s32.totalorder %s35, 1
      %p147 = por %p145, %p146
      %p149 = scmp.ne.s32.totalorder %s134, %s148
      %p150 = scmp.eq.s32.totalorder %s35, 0
      %p151 = por %p149, %p150
      %s153 = sadd.s32 %s152, 1
      %p156 = scmp.eq.s32.totalorder %s29, 1
      %p157 = scmp.ne.s32.totalorder %s152, %s154
      %p158 = scmp.eq.s32.totalorder %s29, 0
      %p159 = por %p157, %p158
      %p160 = scmp.ne.s32.totalorder %s152, %s154
      %p161 = scmp.eq.s32.totalorder %s34, 1
      %p162 = por %p160, %p161
      %p163 = scmp.ne.s32.totalorder %s154, %s155
      %p164 = scmp.eq.s32.totalorder %s34, 0
      %p165 = por %p163, %p164
      %p166 = scmp.ne.s32.totalorder %s154, %s155
      %p167 = scmp.eq.s32.totalorder %s35, 1
      %p168 = por %p166, %p167
      %p170 = scmp.ne.s32.totalorder %s155, %s169
      %p171 = scmp.eq.s32.totalorder %s35, 0
      %p172 = por %p170, %p171
      %s174 = sadd.s32 %s173, 1
      %p177 = scmp.eq.s32.totalorder %s29, 1
      %p178 = scmp.ne.s32.totalorder %s173, %s175
      %p179 = scmp.eq.s32.totalorder %s29, 0
      %p180 = por %p178, %p179
      %p181 = scmp.ne.s32.totalorder %s173, %s175
      %p182 = scmp.eq.s32.totalorder %s34, 1
      %p183 = por %p181, %p182
      %p184 = scmp.ne.s32.totalorder %s175, %s176
      %p185 = scmp.eq.s32.totalorder %s34, 0
      %p186 = por %p184, %p185
      %p187 = scmp.ne.s32.totalorder %s175, %s176
      %p188 = scmp.eq.s32.totalorder %s35, 1
      %p189 = por %p187, %p188
      %p191 = scmp.ne.s32.totalorder %s176, %s190
      %p192 = scmp.eq.s32.totalorder %s35, 0
      %p193 = por %p191, %p192
      %s195 = sadd.s32 %s194, 1
      %p198 = scmp.eq.s32.totalorder %s29, 1
      %p199 = scmp.ne.s32.totalorder %s194, %s196
      %p200 = scmp.eq.s32.totalorder %s29, 0
      %p201 = por %p199, %p200
      %p202 = scmp.ne.s32.totalorder %s194, %s196
      %p203 = scmp.eq.s32.totalorder %s34, 1
      %p204 = por %p202, %p203
      %p205 = scmp.ne.s32.totalorder %s196, %s197
      %p206 = scmp.eq.s32.totalorder %s34, 0
      %p207 = por %p205, %p206
      %p208 = scmp.ne.s32.totalorder %s196, %s197
      %p209 = scmp.eq.s32.totalorder %s35, 1
      %p210 = por %p208, %p209
      %p212 = scmp.ne.s32.totalorder %s197, %s211
      %p213 = scmp.eq.s32.totalorder %s35, 0
      %p214 = por %p212, %p213
      %s216 = sadd.s32 %s215, 1
      %p219 = scmp.eq.s32.totalorder %s29, 1
      %p220 = scmp.ne.s32.totalorder %s215, %s217
      %p221 = scmp.eq.s32.totalorder %s29, 0
      %p222 = por %p220, %p221
      %p223 = scmp.ne.s32.totalorder %s215, %s217
      %p224 = scmp.eq.s32.totalorder %s34, 1
      %p225 = por %p223, %p224
      %p226 = scmp.ne.s32.totalorder %s217, %s218
      %p227 = scmp.eq.s32.totalorder %s34, 0
      %p228 = por %p226, %p227
      %p229 = scmp.ne.s32.totalorder %s217, %s218
      %p230 = scmp.eq.s32.totalorder %s35, 1
      %p231 = por %p229, %p230
      %p233 = scmp.ne.s32.totalorder %s218, %s232
      %p234 = scmp.eq.s32.totalorder %s35, 0
      %p235 = por %p233, %p234
      %s237 = sadd.s32 %s236, 1
      %p240 = scmp.eq.s32.totalorder %s29, 1
      %p241 = scmp.ne.s32.totalorder %s236, %s238
      %p242 = scmp.eq.s32.totalorder %s29, 0
      %p243 = por %p241, %p242
      %p244 = scmp.ne.s32.totalorder %s236, %s238
      %p245 = scmp.eq.s32.totalorder %s34, 1
      %p246 = por %p244, %p245
      %p247 = scmp.ne.s32.totalorder %s238, %s239
      %p248 = scmp.eq.s32.totalorder %s34, 0
      %p249 = por %p247, %p248
      %p250 = scmp.ne.s32.totalorder %s238, %s239
      %p251 = scmp.eq.s32.totalorder %s35, 1
      %p252 = por %p250, %p251
      %p254 = scmp.ne.s32.totalorder %s239, %s253
      %p255 = scmp.eq.s32.totalorder %s35, 0
      %p256 = por %p254, %p255
      %s258 = sadd.s32 %s257, 1
      %p261 = scmp.eq.s32.totalorder %s29, 1
      %p262 = scmp.ne.s32.totalorder %s257, %s259
      %p263 = scmp.eq.s32.totalorder %s29, 0
      %p264 = por %p262, %p263
      %p265 = scmp.ne.s32.totalorder %s257, %s259
      %p266 = scmp.eq.s32.totalorder %s34, 1
      %p267 = por %p265, %p266
      %p268 = scmp.ne.s32.totalorder %s259, %s260
      %p269 = scmp.eq.s32.totalorder %s34, 0
      %p270 = por %p268, %p269
      %p271 = scmp.ne.s32.totalorder %s259, %s260
      %p272 = scmp.eq.s32.totalorder %s35, 1
      %p273 = por %p271, %p272
      %p275 = scmp.ne.s32.totalorder %s260, %s274
      %p276 = scmp.eq.s32.totalorder %s35, 0
      %p277 = por %p275, %p276
      %s279 = sadd.s32 %s278, 1
      %p282 = scmp.eq.s32.totalorder %s29, 1
      %p283 = scmp.ne.s32.totalorder %s278, %s280
      %p284 = scmp.eq.s32.totalorder %s29, 0
      %p285 = por %p283, %p284
      %p286 = scmp.ne.s32.totalorder %s278, %s280
      %p287 = scmp.eq.s32.totalorder %s34, 1
      %p288 = por %p286, %p287
      %p289 = scmp.ne.s32.totalorder %s280, %s281
      %p290 = scmp.eq.s32.totalorder %s34, 0
      %p291 = por %p289, %p290
      %p292 = scmp.ne.s32.totalorder %s280, %s281
      %p293 = scmp.eq.s32.totalorder %s35, 1
      %p294 = por %p292, %p293
      %p296 = scmp.ne.s32.totalorder %s281, %s295
      %p297 = scmp.eq.s32.totalorder %s35, 0
      %p298 = por %p296, %p297
      %s300 = sadd.s32 %s299, 1
      %p303 = scmp.eq.s32.totalorder %s29, 1
      %p304 = scmp.ne.s32.totalorder %s299, %s301
      %p305 = scmp.eq.s32.totalorder %s29, 0
      %p306 = por %p304, %p305
      %p307 = scmp.ne.s32.totalorder %s299, %s301
      %p308 = scmp.eq.s32.totalorder %s34, 1
      %p309 = por %p307, %p308
      %p310 = scmp.ne.s32.totalorder %s301, %s302
      %p311 = scmp.eq.s32.totalorder %s34, 0
      %p312 = por %p310, %p311
      %p313 = scmp.ne.s32.totalorder %s301, %s302
      %p314 = scmp.eq.s32.totalorder %s35, 1
      %p315 = por %p313, %p314
      %p317 = scmp.ne.s32.totalorder %s302, %s316
      %p318 = scmp.eq.s32.totalorder %s35, 0
      %p319 = por %p317, %p318
      %s321 = sadd.s32 %s320, 1
      %p324 = scmp.eq.s32.totalorder %s29, 1
      %p325 = scmp.ne.s32.totalorder %s320, %s322
      %p326 = scmp.eq.s32.totalorder %s29, 0
      %p327 = por %p325, %p326
      %p328 = scmp.ne.s32.totalorder %s320, %s322
      %p329 = scmp.eq.s32.totalorder %s34, 1
      %p330 = por %p328, %p329
      %p331 = scmp.ne.s32.totalorder %s322, %s323
      %p332 = scmp.eq.s32.totalorder %s34, 0
      %p333 = por %p331, %p332
      %p334 = scmp.ne.s32.totalorder %s322, %s323
      %p335 = scmp.eq.s32.totalorder %s35, 1
      %p336 = por %p334, %p335
      %p338 = scmp.ne.s32.totalorder %s323, %s337
      %p339 = scmp.eq.s32.totalorder %s35, 0
      %p340 = por %p338, %p339
      %s341 = ssub.s32 %s29, %s36
      %p342 = scmp.eq.s32.totalorder %s341, 0
      %s344 = sadd.s32 %s343, 1
      %s345 = scalar_select %p342, %s343, %s344
      %p348 = pneg %p342
      %p349 = scmp.eq.s32.totalorder %s29, 1
      %p350 = por %p348, %p349
      %p351 = scmp.ne.s32.totalorder %s343, %s346
      %p352 = scmp.eq.s32.totalorder %s29, 0
      %p353 = por %p351, %p352
      %p354 = scmp.ne.s32.totalorder %s343, %s346
      %p355 = scmp.eq.s32.totalorder %s34, 1
      %p356 = por %p354, %p355
      %p357 = scmp.ne.s32.totalorder %s346, %s347
      %p358 = scmp.eq.s32.totalorder %s34, 0
      %p359 = por %p357, %p358
      %p360 = scmp.ne.s32.totalorder %s346, %s347
      %p361 = scmp.eq.s32.totalorder %s35, 1
      %p362 = por %p360, %p361
      %p364 = scmp.ne.s32.totalorder %s347, %s363
      %p365 = scmp.eq.s32.totalorder %s35, 0
      %p366 = por %p364, %p365
      %p367 = scmp.le.s32.totalorder 1, %s29
      %p368 = scmp.lt.s32.totalorder %s29, 3
      %p369 = pnand %p367, %p368
      %p370 = pneg %p369
      // Predicated region
      $region9: #{tpu_custom_call.1} parent=5 // pred_check
        _
      $region10: #{tpu_custom_call.1} parent=5 // pred_check_branch
        %372 = sbr.rel (%p369) target = $region12
      $region11: #{tpu_custom_call.1} parent=5 // pred_region
        %s373 = ssub.s32 %s29, 1
        // Predicated region
        $region13: #{tpu_custom_call.1} parent=11 // pred_check
          %p374 = pneg %p102
        $region14: #{tpu_custom_call.1} parent=11 // pred_check_branch
          %376 = sbr.rel (%p374) target = $region16
        $region15: #{tpu_custom_call.1} parent=11 // pred_region
          %s378 = ssub.s32 16, 16
          %379 = vsyncadd [#allocation6], %s378
          %s381 = sshll.u32 [#allocation5], 4
          %s382 = int_to_ptr.vmem [resolvable:$true] %s381
          %384 = dma.hbm_to_vmem [thread:$0]  %s2, 16, %s382, [#allocation6]
        $region16: #{tpu_custom_call.1} parent=11 // pred_fallthru
          _
        // Predicated region
        $region17: #{tpu_custom_call.1} parent=11 // pred_check
          %p385 = pneg %p123
        $region18: #{tpu_custom_call.1} parent=11 // pred_check_branch
          %387 = sbr.rel (%p385) target = $region20
        $region19: #{tpu_custom_call.1} parent=11 // pred_region
          _
        $region20: #{tpu_custom_call.1} parent=11 // pred_fallthru
          _
        // Predicated region
        $region21: #{tpu_custom_call.1} parent=11 // pred_check
          %p388 = pneg %p144
        $region22: #{tpu_custom_call.1} parent=11 // pred_check_branch
          %390 = sbr.rel (%p388) target = $region24
        $region23: #{tpu_custom_call.1} parent=11 // pred_region
          %s392 = ssub.s32 3072, 3072
          %393 = vsyncadd [#allocation6], %s392
          %s394 = sshll.u32 [#allocation7], 4
          %s395 = int_to_ptr.vmem [resolvable:$true] %s394
          %400 = dma.hbm_to_vmem [thread:$0]  %s4, 3072, %s395, [#allocation6], 192, 192, 12
        $region24: #{tpu_custom_call.1} parent=11 // pred_fallthru
          _
        // Predicated region
        $region25: #{tpu_custom_call.1} parent=11 // pred_check
          %p401 = pneg %p165
        $region26: #{tpu_custom_call.1} parent=11 // pred_check_branch
          %403 = sbr.rel (%p401) target = $region28
        $region27: #{tpu_custom_call.1} parent=11 // pred_region
          _
        $region28: #{tpu_custom_call.1} parent=11 // pred_fallthru
          _
        // Predicated region
        $region29: #{tpu_custom_call.1} parent=11 // pred_check
          %p404 = pneg %p186
        $region30: #{tpu_custom_call.1} parent=11 // pred_check_branch
          %406 = sbr.rel (%p404) target = $region32
        $region31: #{tpu_custom_call.1} parent=11 // pred_region
          %s408 = ssub.s32 1024, 1024
          %409 = vsyncadd [#allocation9], %s408
          %s410 = sshll.u32 [#allocation8], 4
          %s411 = int_to_ptr.vmem [resolvable:$true] %s410
          %416 = dma.hbm_to_vmem [thread:$0]  %s6, 1024, %s411, [#allocation9], 64, 64, 4
        $region32: #{tpu_custom_call.1} parent=11 // pred_fallthru
          _
        // Predicated region
        $region33: #{tpu_custom_call.1} parent=11 // pred_check
          %p417 = pneg %p207
        $region34: #{tpu_custom_call.1} parent=11 // pred_check_branch
          %419 = sbr.rel (%p417) target = $region36
        $region35: #{tpu_custom_call.1} parent=11 // pred_region
          _
        $region36: #{tpu_custom_call.1} parent=11 // pred_fallthru
          _
        // Predicated region
        $region37: #{tpu_custom_call.1} parent=11 // pred_check
          %p420 = pneg %p228
        $region38: #{tpu_custom_call.1} parent=11 // pred_check_branch
          %422 = sbr.rel (%p420) target = $region40
        $region39: #{tpu_custom_call.1} parent=11 // pred_region
          _
        $region40: #{tpu_custom_call.1} parent=11 // pred_fallthru
          _
        // Predicated region
        $region41: #{tpu_custom_call.1} parent=11 // pred_check
          %p423 = pneg %p249
        $region42: #{tpu_custom_call.1} parent=11 // pred_check_branch
          %425 = sbr.rel (%p423) target = $region44
        $region43: #{tpu_custom_call.1} parent=11 // pred_region
          _
        $region44: #{tpu_custom_call.1} parent=11 // pred_fallthru
          _
        // Predicated region
        $region45: #{tpu_custom_call.1} parent=11 // pred_check
          %p426 = pneg %p270
        $region46: #{tpu_custom_call.1} parent=11 // pred_check_branch
          %428 = sbr.rel (%p426) target = $region48
        $region47: #{tpu_custom_call.1} parent=11 // pred_region
          %s430 = ssub.s32 2048, 2048
          %431 = vsyncadd [#allocation9], %s430
          %s432 = sshll.u32 [#allocation10], 4
          %s433 = int_to_ptr.vmem [resolvable:$true] %s432
          %438 = dma.hbm_to_vmem [thread:$0]  %s10, 2048, %s433, [#allocation9], 128, 128, 8
        $region48: #{tpu_custom_call.1} parent=11 // pred_fallthru
          _
        // Predicated region
        $region49: #{tpu_custom_call.1} parent=11 // pred_check
          %p439 = pneg %p291
        $region50: #{tpu_custom_call.1} parent=11 // pred_check_branch
          %441 = sbr.rel (%p439) target = $region52
        $region51: #{tpu_custom_call.1} parent=11 // pred_region
          _
        $region52: #{tpu_custom_call.1} parent=11 // pred_fallthru
          _
        // Predicated region
        $region53: #{tpu_custom_call.1} parent=11 // pred_check
          %p442 = pneg %p312
        $region54: #{tpu_custom_call.1} parent=11 // pred_check_branch
          %444 = sbr.rel (%p442) target = $region56
        $region55: #{tpu_custom_call.1} parent=11 // pred_region
          %s446 = ssub.s32 2048, 2048
          %447 = vsyncadd [#allocation12], %s446
          %s448 = sshll.u32 [#allocation11], 4
          %s449 = int_to_ptr.vmem [resolvable:$true] %s448
          %454 = dma.hbm_to_vmem [thread:$0]  %s12, 2048, %s449, [#allocation12], 64, 64, 4
        $region56: #{tpu_custom_call.1} parent=11 // pred_fallthru
          _
        // Predicated region
        $region57: #{tpu_custom_call.1} parent=11 // pred_check
          %p455 = pneg %p333
        $region58: #{tpu_custom_call.1} parent=11 // pred_check_branch
          %457 = sbr.rel (%p455) target = $region60
        $region59: #{tpu_custom_call.1} parent=11 // pred_region
          _
        $region60: #{tpu_custom_call.1} parent=11 // pred_fallthru
          _
      $region12: #{tpu_custom_call.1} parent=5 // pred_fallthru
        _
      %p458 = scmp.lt.s32.totalorder %s29, 2
      // Predicated region
      $region61: #{tpu_custom_call.1} parent=5 // pred_check
        %p459 = pneg %p458
      $region62: #{tpu_custom_call.1} parent=5 // pred_check_branch
        %461 = sbr.rel (%p459) target = $region64
      $region63: #{tpu_custom_call.1} parent=5 // pred_region
        // Predicated region
        $region65: #{tpu_custom_call.1} parent=63 // pred_check
          %p462 = pneg %p49
        $region66: #{tpu_custom_call.1} parent=63 // pred_check_branch
          %464 = sbr.rel (%p462) target = $region68
        $region67: #{tpu_custom_call.1} parent=63 // pred_region
          %s465 = sand.u32 %s39, 1
          %s466 = scalar_lea.sflag [#allocation3], %s465
          %s467 = sand.u32 %s39, 1
          %s468 = smul.addr %s467, 8
          %s469 = scalar_lea.vmem [#allocation2], %s468
          %s471 = ssub.s32 128, 128
          %472 = vsyncadd %s466, %s471
          %s473 = smul.addr %s29, 128
          %s474 = scalar_lea.hbm %s0, %s473
          %s476 = sshll.u32 %s469, 4
          %s477 = int_to_ptr.vmem [resolvable:$true] %s476
          %479 = dma.hbm_to_vmem [thread:$0]  %s474, 128, %s477, %s466
        $region68: #{tpu_custom_call.1} parent=63 // pred_fallthru
          _
        // Predicated region
        $region69: #{tpu_custom_call.1} parent=63 // pred_check
          %p480 = pneg %p75
        $region70: #{tpu_custom_call.1} parent=63 // pred_check_branch
          %482 = sbr.rel (%p480) target = $region72
        $region71: #{tpu_custom_call.1} parent=63 // pred_region
          %p483 = scmp.lt.s32.totalorder %s29, 1
          %s484 = scalar_select %p483, %s29, 1
          %s485 = scalar_lea.vmem %s1, %s484
        $region72: #{tpu_custom_call.1} parent=63 // pred_fallthru
          _
      $region64: #{tpu_custom_call.1} parent=5 // pred_fallthru
        _
      %p486 = scmp.le.s32.totalorder 1, %s29
      %p487 = scmp.lt.s32.totalorder %s29, 3
      %p488 = pnand %p486, %p487
      %p489 = pneg %p488
      // Predicated region
      $region73: #{tpu_custom_call.1} parent=5 // pred_check
        _
      $region74: #{tpu_custom_call.1} parent=5 // pred_check_branch
        %491 = sbr.rel (%p488) target = $region76
      $region75: #{tpu_custom_call.1} parent=5 // pred_region
        %s492 = ssub.s32 %s29, 1
        %s493 = sand.u32 %s42, 1
        %s494 = scalar_lea.sflag [#allocation3], %s493
        %s495 = sand.u32 %s42, 1
        %s496 = smul.addr %s495, 8
        %s497 = scalar_lea.vmem [#allocation2], %s496
        // Predicated region
        $region77: #{tpu_custom_call.1} parent=75 // pred_check
          %p498 = pneg %p55
        $region78: #{tpu_custom_call.1} parent=75 // pred_check_branch
          %500 = sbr.rel (%p498) target = $region80
        $region79: #{tpu_custom_call.1} parent=75 // pred_region
          %501 = dma.done %s494, 128
        $region80: #{tpu_custom_call.1} parent=75 // pred_fallthru
          _
        // Predicated region
        $region81: #{tpu_custom_call.1} parent=75 // pred_check
          %p502 = pneg %p102
        $region82: #{tpu_custom_call.1} parent=75 // pred_check_branch
          %504 = sbr.rel (%p502) target = $region84
        $region83: #{tpu_custom_call.1} parent=75 // pred_region
          %505 = dma.done [#allocation6], 16
        $region84: #{tpu_custom_call.1} parent=75 // pred_fallthru
          _
        // Predicated region
        $region85: #{tpu_custom_call.1} parent=75 // pred_check
          %p506 = pneg %p144
        $region86: #{tpu_custom_call.1} parent=75 // pred_check_branch
          %508 = sbr.rel (%p506) target = $region88
        $region87: #{tpu_custom_call.1} parent=75 // pred_region
          %509 = dma.done [#allocation6], 3072
        $region88: #{tpu_custom_call.1} parent=75 // pred_fallthru
          _
        // Predicated region
        $region89: #{tpu_custom_call.1} parent=75 // pred_check
          %p510 = pneg %p186
        $region90: #{tpu_custom_call.1} parent=75 // pred_check_branch
          %512 = sbr.rel (%p510) target = $region92
        $region91: #{tpu_custom_call.1} parent=75 // pred_region
          %513 = dma.done [#allocation9], 1024
        $region92: #{tpu_custom_call.1} parent=75 // pred_fallthru
          _
        // Predicated region
        $region93: #{tpu_custom_call.1} parent=75 // pred_check
          %p514 = pneg %p270
        $region94: #{tpu_custom_call.1} parent=75 // pred_check_branch
          %516 = sbr.rel (%p514) target = $region96
        $region95: #{tpu_custom_call.1} parent=75 // pred_region
          %517 = dma.done [#allocation9], 2048
        $region96: #{tpu_custom_call.1} parent=75 // pred_fallthru
          _
        // Predicated region
        $region97: #{tpu_custom_call.1} parent=75 // pred_check
          %p518 = pneg %p312
        $region98: #{tpu_custom_call.1} parent=75 // pred_check_branch
          %520 = sbr.rel (%p518) target = $region100
        $region99: #{tpu_custom_call.1} parent=75 // pred_region
          %521 = dma.done [#allocation12], 2048
        $region100: #{tpu_custom_call.1} parent=75 // pred_fallthru
          _
        %s522 = sand.u32 %s42, 1
        %s523 = scalar_lea.sflag [#allocation3], %s522
        %s524 = sand.u32 %s42, 1
        %s525 = smul.addr %s524, 8
        %s526 = scalar_lea.vmem [#allocation2], %s525
        %p527 = pneg %p55
        %p528 = pneg %p52
        %p529 = scmp.lt.s32.totalorder %s34, 1
        %s530 = scalar_select %p529, %s34, 1
        %s531 = scalar_lea.vmem %s1, %s530
        %p532 = pneg %p81
        %p533 = pneg %p78
        %p534 = pneg %p102
        %p535 = pneg %p99
        %p536 = pneg %p123
        %p537 = pneg %p120
        %p538 = pneg %p144
        %p539 = pneg %p141
        %p540 = pneg %p165
        %p541 = pneg %p162
        %p542 = pneg %p186
        %p543 = pneg %p183
        %p544 = pneg %p207
        %p545 = pneg %p204
        %p546 = pneg %p228
        %p547 = pneg %p225
        %p548 = pneg %p249
        %p549 = pneg %p246
        %p550 = pneg %p270
        %p551 = pneg %p267
        %p552 = pneg %p291
        %p553 = pneg %p288
        %p554 = pneg %p312
        %p555 = pneg %p309
        %p556 = pneg %p333
        %p557 = pneg %p330
        %p558 = pneg %p359
        %p559 = pneg %p356
        %s560 = sand.u32 %s346, 1
        %s561 = scalar_lea.sflag [#allocation4], %s560
        %s562 = sand.u32 %s346, 1
        %s563 = smul.addr %s562, 8
        %s564 = scalar_lea.vmem [#allocation13], %s563
        %p565 = scmp.lt.s32.totalorder %s34, 1
        %s566 = scalar_select %p565, %s34, 1
        %s567 = scalar_lea.vmem %s1, %s566
        %v569 = vld [vmem:[%s497] sm:$0xff]
        %v570 = vld [vmem:[%s567] sm:$0x1]
        %v571 = vld [vmem:[#allocation5] sm:$0x1]
        %v572 = vld [vmem:[%s3] sm:$0x1]
        %573 = vadd.xlane.f32.xlu0 %v569
        %v574 = vpop.xlane.xlu0 %573
        %v575 = vrcp.pop 128.0
        %v576 = vmul.f32 %v574, %v575
        %v577 = vsub.f32 %v569, %v576
        %v578 = vmul.f32 %v577, %v577
        %579 = vadd.xlane.f32.xlu0 %v578
        %v580 = vpop.xlane.xlu0 %579
        %v581 = vmul.f32 %v580, 0.007874016
        %v582 = vrsqrt.pop %v581
        %v583 = vmul.f32 %v581, %v582
        %vm584 = vcmp.eq.f32.partialorder %v581, inf
        %v585 = vsel %vm584, %v581, %v583
        %vm586 = vcmp.eq.f32.partialorder %v581, 0.0
        %v587 = vand.u32 %v581, 2147483648
        %v588 = vsel %vm586, %v587, %v585
        %v589 = vadd.f32 %v588, 1e-06
        %v590 = vrcp.pop %v589
        %v591 = vmul.f32 %v577, %v590
        %v593 = vlaneseq
        %v594 = vshrl.u32 %v593, 7
        %v595 = vsub.s32 0, %v594
        %v596 = vrot.slane %v571, %v595
        %v598 = vmul.f32 %v596, %v591
        %v600 = vlaneseq
        %v601 = vshrl.u32 %v600, 7
        %v602 = vsub.s32 0, %v601
        %v603 = vrot.slane %v572, %v602
        %v605 = vadd.f32 %v598, %v603
        %v606 = vpack.c.bf16 %v605, %v605
        %v607 = vld [vmem:[#allocation7] sm:$0xff]
        %v608 = vld [vmem:[#allocation7 + $0x8] sm:$0xf]
        %v609 = vld [vmem:[#allocation7 + $0xc] sm:$0xff]
        %v610 = vld [vmem:[#allocation7 + $0x14] sm:$0xf]
        %v611 = vld [vmem:[#allocation7 + $0x18] sm:$0xff]
        %v612 = vld [vmem:[#allocation7 + $0x20] sm:$0xf]
        %v613 = vld [vmem:[#allocation7 + $0x24] sm:$0xff]
        %v614 = vld [vmem:[#allocation7 + $0x2c] sm:$0xf]
        %v615 = vld [vmem:[#allocation7 + $0x30] sm:$0xff]
        %v616 = vld [vmem:[#allocation7 + $0x38] sm:$0xf]
        %v617 = vld [vmem:[#allocation7 + $0x3c] sm:$0xff]
        %v618 = vld [vmem:[#allocation7 + $0x44] sm:$0xf]
        %v619 = vld [vmem:[#allocation7 + $0x48] sm:$0xff]
        %v620 = vld [vmem:[#allocation7 + $0x50] sm:$0xf]
        %v621 = vld [vmem:[#allocation7 + $0x54] sm:$0xff]
        %v622 = vld [vmem:[#allocation7 + $0x5c] sm:$0xf]
        %v623 = vld [vmem:[#allocation7 + $0x60] sm:$0xff]
        %v624 = vld [vmem:[#allocation7 + $0x68] sm:$0xf]
        %v625 = vld [vmem:[#allocation7 + $0x6c] sm:$0xff]
        %v626 = vld [vmem:[#allocation7 + $0x74] sm:$0xf]
        %v627 = vld [vmem:[#allocation7 + $0x78] sm:$0xff]
        %v628 = vld [vmem:[#allocation7 + $0x80] sm:$0xf]
        %v629 = vld [vmem:[#allocation7 + $0x84] sm:$0xff]
        %v630 = vld [vmem:[#allocation7 + $0x8c] sm:$0xf]
        %v631 = vld [vmem:[#allocation7 + $0x90] sm:$0xff]
        %v632 = vld [vmem:[#allocation7 + $0x98] sm:$0xf]
        %v633 = vld [vmem:[#allocation7 + $0x9c] sm:$0xff]
        %v634 = vld [vmem:[#allocation7 + $0xa4] sm:$0xf]
        %v635 = vld [vmem:[#allocation7 + $0xa8] sm:$0xff]
        %v636 = vld [vmem:[#allocation7 + $0xb0] sm:$0xf]
        %v637 = vld [vmem:[#allocation7 + $0xb4] sm:$0xff]
        %v638 = vld [vmem:[#allocation7 + $0xbc] sm:$0xf]
        %v639 = vld [vmem:[%s5] sm:$0x7]
        %v641 = vlaneseq
        %v642 = vshrl.u32 %v641, 7
        %v643 = vsub.s32 0, %v642
        %v644 = vrot.slane %v639, %v643
        %v645 = vlaneseq
        %v646 = vshrl.u32 %v645, 7
        %v647 = vsub.s32 1, %v646
        %v648 = vrot.slane %v639, %v647
        %v649 = vlaneseq
        %v650 = vshrl.u32 %v649, 7
        %v651 = vsub.s32 2, %v650
        %v652 = vrot.slane %v639, %v651
        %v688 = vunpack.c.l.b16 %v607
        %v689 = vunpack.c.h.b16 %v607
        %v690 = vunpack.c.l.b16 %v608
        %v691 = vunpack.c.l.b16 %v609
        %v692 = vunpack.c.h.b16 %v609
        %v693 = vunpack.c.l.b16 %v610
        %v694 = vunpack.c.l.b16 %v611
        %v695 = vunpack.c.h.b16 %v611
        %v696 = vunpack.c.l.b16 %v612
        %v697 = vunpack.c.l.b16 %v613
        %v698 = vunpack.c.h.b16 %v613
        %v699 = vunpack.c.l.b16 %v614
        %v700 = vunpack.c.l.b16 %v615
        %v701 = vunpack.c.h.b16 %v615
        %v702 = vunpack.c.l.b16 %v616
        %v703 = vunpack.c.l.b16 %v617
        %v704 = vunpack.c.h.b16 %v617
        %v705 = vunpack.c.l.b16 %v618
        %v706 = vunpack.c.l.b16 %v619
        %v707 = vunpack.c.h.b16 %v619
        %v708 = vunpack.c.l.b16 %v620
        %v709 = vunpack.c.l.b16 %v621
        %v710 = vunpack.c.h.b16 %v621
        %v711 = vunpack.c.l.b16 %v622
        %v712 = vunpack.c.l.b16 %v623
        %v713 = vunpack.c.h.b16 %v623
        %v714 = vunpack.c.l.b16 %v624
        %v715 = vunpack.c.l.b16 %v625
        %v716 = vunpack.c.h.b16 %v625
        %v717 = vunpack.c.l.b16 %v626
        %v718 = vunpack.c.l.b16 %v627
        %v719 = vunpack.c.h.b16 %v627
        %v720 = vunpack.c.l.b16 %v628
        %v721 = vunpack.c.l.b16 %v629
        %v722 = vunpack.c.h.b16 %v629
        %v723 = vunpack.c.l.b16 %v630
        %v724 = vunpack.c.l.b16 %v631
        %v725 = vunpack.c.h.b16 %v631
        %v726 = vunpack.c.l.b16 %v632
        %v727 = vunpack.c.l.b16 %v633
        %v728 = vunpack.c.h.b16 %v633
        %v729 = vunpack.c.l.b16 %v634
        %v730 = vunpack.c.l.b16 %v635
        %v731 = vunpack.c.h.b16 %v635
        %v732 = vunpack.c.l.b16 %v636
        %v733 = vunpack.c.l.b16 %v637
        %v734 = vunpack.c.h.b16 %v637
        %v735 = vunpack.c.l.b16 %v638
        %v736 = vpack.c.b16 %v691, %v688
        %v737 = vpack.c.b16 %v692, %v689
        %v738 = vpack.c.b16 %v693, %v690
        %v739 = vpack.c.b16 %v697, %v694
        %v740 = vpack.c.b16 %v698, %v695
        %v741 = vpack.c.b16 %v699, %v696
        %v742 = vpack.c.b16 %v703, %v700
        %v743 = vpack.c.b16 %v704, %v701
        %v744 = vpack.c.b16 %v705, %v702
        %v745 = vpack.c.b16 %v709, %v706
        %v746 = vpack.c.b16 %v710, %v707
        %v747 = vpack.c.b16 %v711, %v708
        %v748 = vpack.c.b16 %v715, %v712
        %v749 = vpack.c.b16 %v716, %v713
        %v750 = vpack.c.b16 %v717, %v714
        %v751 = vpack.c.b16 %v721, %v718
        %v752 = vpack.c.b16 %v722, %v719
        %v753 = vpack.c.b16 %v723, %v720
        %v754 = vpack.c.b16 %v727, %v724
        %v755 = vpack.c.b16 %v728, %v725
        %v756 = vpack.c.b16 %v729, %v726
        %v757 = vpack.c.b16 %v733, %v730
        %v758 = vpack.c.b16 %v734, %v731
        %v759 = vpack.c.b16 %v735, %v732
        %784 = vmatprep.subr.bf16.mxu0 %v737
        %785 = vmatpush1.bf16.msra.mxu0 %v736
        %786 = vmatprep.subr.bf16.mxu0 %v740
        %787 = vmatpush1.bf16.msra.mxu0 %v739
        %788 = vmatprep.subr.bf16.mxu0 %v743
        %789 = vmatpush1.bf16.msra.mxu0 %v742
        %790 = vmatprep.subr.bf16.mxu0 %v746
        %791 = vmatpush1.bf16.msra.mxu0 %v745
        %792 = vmatprep.subr.bf16.mxu0 %v749
        %793 = vmatpush1.bf16.msra.mxu0 %v748
        %794 = vmatprep.subr.bf16.mxu0 %v752
        %795 = vmatpush1.bf16.msra.mxu0 %v751
        %796 = vmatprep.subr.bf16.mxu0 %v755
        %797 = vmatpush1.bf16.msra.mxu0 %v754
        %798 = vmatprep.subr.bf16.mxu0 %v758
        %799 = vmatpush1.bf16.msra.mxu0 %v757
        %800 = vmatprep.subr.bf16.mxu0 0
        %801 = vmatpush1.bf16.msra.mxu0 0
        %802 = vmatprep.subr.bf16.mxu0 0
        %803 = vmatpush1.bf16.msra.mxu0 0
        %804 = vmatprep.subr.bf16.mxu0 0
        %805 = vmatpush1.bf16.msra.mxu0 0
        %806 = vmatprep.subr.bf16.mxu0 0
        %807 = vmatpush1.bf16.msra.mxu0 0
        %808 = vmatprep.subr.bf16.mxu0 0
        %809 = vmatpush1.bf16.msra.mxu0 0
        %810 = vmatprep.subr.bf16.mxu0 0
        %811 = vmatpush1.bf16.msra.mxu0 0
        %812 = vmatprep.subr.bf16.mxu0 0
        %813 = vmatpush1.bf16.msra.mxu0 0
        %814 = vmatprep.subr.bf16.mxu0 0
        %815 = vmatpush1.bf16.msra.mxu0 0
        %816 = vmatprep.mubr.bf16.mxu0 0
        %817 = vmatmul.mubr.bf16.gmra.mrb[0].mxu0 %v606
        %v818 = vpop.f32.mrb[0].mxu0
        %v819 = vadd.f32 %v644, %v818
        %v820 = vpop.f32.mrb[0].mxu0
        %v821 = vadd.f32 %v648, %v820
        %v822 = vpop.f32.mrb[0].mxu0
        %v823 = vpop.f32.mrb[0].mxu0
        %824 = vdwg.mxu0
        %825 = vmatprep.subr.bf16.mxu0 0
        %826 = vmatpush1.bf16.msra.mxu0 %v738
        %827 = vmatprep.subr.bf16.mxu0 0
        %828 = vmatpush1.bf16.msra.mxu0 %v741
        %829 = vmatprep.subr.bf16.mxu0 0
        %830 = vmatpush1.bf16.msra.mxu0 %v744
        %831 = vmatprep.subr.bf16.mxu0 0
        %832 = vmatpush1.bf16.msra.mxu0 %v747
        %833 = vmatprep.subr.bf16.mxu0 0
        %834 = vmatpush1.bf16.msra.mxu0 %v750
        %835 = vmatprep.subr.bf16.mxu0 0
        %836 = vmatpush1.bf16.msra.mxu0 %v753
        %837 = vmatprep.subr.bf16.mxu0 0
        %838 = vmatpush1.bf16.msra.mxu0 %v756
        %839 = vmatprep.subr.bf16.mxu0 0
        %840 = vmatpush1.bf16.msra.mxu0 %v759
        %841 = vmatprep.subr.bf16.mxu0 0
        %842 = vmatpush1.bf16.msra.mxu0 0
        %843 = vmatprep.subr.bf16.mxu0 0
        %844 = vmatpush1.bf16.msra.mxu0 0
        %845 = vmatprep.subr.bf16.mxu0 0
        %846 = vmatpush1.bf16.msra.mxu0 0
        %847 = vmatprep.subr.bf16.mxu0 0
        %848 = vmatpush1.bf16.msra.mxu0 0
        %849 = vmatprep.subr.bf16.mxu0 0
        %850 = vmatpush1.bf16.msra.mxu0 0
        %851 = vmatprep.subr.bf16.mxu0 0
        %852 = vmatpush1.bf16.msra.mxu0 0
        %853 = vmatprep.subr.bf16.mxu0 0
        %854 = vmatpush1.bf16.msra.mxu0 0
        %855 = vmatprep.subr.bf16.mxu0 0
        %856 = vmatpush1.bf16.msra.mxu0 0
        %857 = vmatprep.mubr.bf16.mxu0 0
        %858 = vmatmul.mubr.bf16.gmra.mrb[0].mxu0 %v606
        %v859 = vpop.f32.mrb[0].mxu0
        %v860 = vadd.f32 %v652, %v859
        %v861 = vpop.f32.mrb[0].mxu0
        %v862 = vpop.f32.mrb[0].mxu0
        %v863 = vpop.f32.mrb[0].mxu0
        %864 = vdwg.mxu0
        %866 = vrot.lane.b32.xlu0 %v819, 96
        %v867 = vpop.permute.xlu0 %866
        %869 = vrot.lane.b32.xlu0 %v819, 64
        %v870 = vpop.permute.xlu0 %869
        %872 = vrot.lane.b32.xlu0 %v819, 32
        %v873 = vpop.permute.xlu0 %872
        %876 = vrot.lane.b32.xlu0 %v821, 96
        %v877 = vpop.permute.xlu0 %876
        %879 = vrot.lane.b32.xlu0 %v821, 64
        %v880 = vpop.permute.xlu0 %879
        %882 = vrot.lane.b32.xlu0 %v821, 32
        %v883 = vpop.permute.xlu0 %882
        %886 = vrot.lane.b32.xlu0 %v860, 96
        %v887 = vpop.permute.xlu0 %886
        %889 = vrot.lane.b32.xlu0 %v860, 64
        %v890 = vpop.permute.xlu0 %889
        %892 = vrot.lane.b32.xlu0 %v860, 32
        %v893 = vpop.permute.xlu0 %892
        %v895 = vcombine.low %v819, %v870
        %v896 = vcombine.high %v819, %v870
        %v898 = vunpack.c.l.s4 1983009808
        %v899 = vunpack.c.0.s8 %v898
        %v900 = vlaneseq
        %v901 = vshrl.u32 %v900, 7
        %v902 = vsub.s32 %v899, %v901
        %v903 = vrot.slane %v895, %v902
        %v905 = vunpack.c.l.s4 1983009808
        %v906 = vunpack.c.0.s8 %v905
        %v907 = vlaneseq
        %v908 = vshrl.u32 %v907, 7
        %v909 = vsub.s32 %v906, %v908
        %v910 = vrot.slane %v896, %v909
        %v911 = vcombine.low %v867, %v873
        %v912 = vcombine.high %v867, %v873
        %v914 = vunpack.c.l.s4 1983009808
        %v915 = vunpack.c.0.s8 %v914
        %v916 = vlaneseq
        %v917 = vshrl.u32 %v916, 7
        %v918 = vsub.s32 %v915, %v917
        %v919 = vrot.slane %v911, %v918
        %v921 = vunpack.c.l.s4 1983009808
        %v922 = vunpack.c.0.s8 %v921
        %v923 = vlaneseq
        %v924 = vshrl.u32 %v923, 7
        %v925 = vsub.s32 %v922, %v924
        %v926 = vrot.slane %v912, %v925
        %v927 = vcombine.low %v821, %v880
        %v928 = vcombine.high %v821, %v880
        %v930 = vunpack.c.l.s4 1983009808
        %v931 = vunpack.c.0.s8 %v930
        %v932 = vlaneseq
        %v933 = vshrl.u32 %v932, 7
        %v934 = vsub.s32 %v931, %v933
        %v935 = vrot.slane %v927, %v934
        %v937 = vunpack.c.l.s4 1983009808
        %v938 = vunpack.c.0.s8 %v937
        %v939 = vlaneseq
        %v940 = vshrl.u32 %v939, 7
        %v941 = vsub.s32 %v938, %v940
        %v942 = vrot.slane %v928, %v941
        %v943 = vcombine.low %v877, %v883
        %v944 = vcombine.high %v877, %v883
        %v946 = vunpack.c.l.s4 1983009808
        %v947 = vunpack.c.0.s8 %v946
        %v948 = vlaneseq
        %v949 = vshrl.u32 %v948, 7
        %v950 = vsub.s32 %v947, %v949
        %v951 = vrot.slane %v943, %v950
        %v953 = vunpack.c.l.s4 1983009808
        %v954 = vunpack.c.0.s8 %v953
        %v955 = vlaneseq
        %v956 = vshrl.u32 %v955, 7
        %v957 = vsub.s32 %v954, %v956
        %v958 = vrot.slane %v944, %v957
        %v959 = vcombine.low %v903, %v919
        %v960 = vcombine.high %v903, %v919
        %v962 = vunpack.c.l.s4 1934713408
        %v963 = vunpack.c.0.s8 %v962
        %v964 = vlaneseq
        %v965 = vshrl.u32 %v964, 7
        %v966 = vsub.s32 %v963, %v965
        %v967 = vrot.slane %v959, %v966
        %v969 = vunpack.c.l.s4 1934713408
        %v970 = vunpack.c.0.s8 %v969
        %v971 = vlaneseq
        %v972 = vshrl.u32 %v971, 7
        %v973 = vsub.s32 %v970, %v972
        %v974 = vrot.slane %v960, %v973
        %v975 = vcombine.low %v910, %v926
        %v976 = vcombine.high %v910, %v926
        %v978 = vunpack.c.l.s4 1934713408
        %v979 = vunpack.c.0.s8 %v978
        %v980 = vlaneseq
        %v981 = vshrl.u32 %v980, 7
        %v982 = vsub.s32 %v979, %v981
        %v983 = vrot.slane %v975, %v982
        %v985 = vunpack.c.l.s4 1934713408
        %v986 = vunpack.c.0.s8 %v985
        %v987 = vlaneseq
        %v988 = vshrl.u32 %v987, 7
        %v989 = vsub.s32 %v986, %v988
        %v990 = vrot.slane %v976, %v989
        %v991 = vcombine.low %v935, %v951
        %v992 = vcombine.high %v935, %v951
        %v994 = vunpack.c.l.s4 1934713408
        %v995 = vunpack.c.0.s8 %v994
        %v996 = vlaneseq
        %v997 = vshrl.u32 %v996, 7
        %v998 = vsub.s32 %v995, %v997
        %v999 = vrot.slane %v991, %v998
        %v1001 = vunpack.c.l.s4 1934713408
        %v1002 = vunpack.c.0.s8 %v1001
        %v1003 = vlaneseq
        %v1004 = vshrl.u32 %v1003, 7
        %v1005 = vsub.s32 %v1002, %v1004
        %v1006 = vrot.slane %v992, %v1005
        %v1007 = vcombine.low %v942, %v958
        %v1008 = vcombine.high %v942, %v958
        %v1010 = vunpack.c.l.s4 1934713408
        %v1011 = vunpack.c.0.s8 %v1010
        %v1012 = vlaneseq
        %v1013 = vshrl.u32 %v1012, 7
        %v1014 = vsub.s32 %v1011, %v1013
        %v1015 = vrot.slane %v1007, %v1014
        %v1017 = vunpack.c.l.s4 1934713408
        %v1018 = vunpack.c.0.s8 %v1017
        %v1019 = vlaneseq
        %v1020 = vshrl.u32 %v1019, 7
        %v1021 = vsub.s32 %v1018, %v1020
        %v1022 = vrot.slane %v1008, %v1021
        %v1023 = vcombine.low %v967, %v999
        %v1024 = vcombine.high %v967, %v999
        %v1025 = vcombine.low %v974, %v1006
        %v1026 = vcombine.high %v974, %v1006
        %v1027 = vcombine.low %v983, %v1015
        %v1028 = vcombine.high %v983, %v1015
        %v1029 = vcombine.low %v990, %v1022
        %v1030 = vcombine.high %v990, %v1022
        %v1031 = vcombine.low %v860, %v890
        %v1032 = vcombine.high %v860, %v890
        %v1034 = vunpack.c.l.s4 1983009808
        %v1035 = vunpack.c.0.s8 %v1034
        %v1036 = vlaneseq
        %v1037 = vshrl.u32 %v1036, 7
        %v1038 = vsub.s32 %v1035, %v1037
        %v1039 = vrot.slane %v1031, %v1038
        %v1041 = vunpack.c.l.s4 1983009808
        %v1042 = vunpack.c.0.s8 %v1041
        %v1043 = vlaneseq
        %v1044 = vshrl.u32 %v1043, 7
        %v1045 = vsub.s32 %v1042, %v1044
        %v1046 = vrot.slane %v1032, %v1045
        %v1047 = vcombine.low %v887, %v893
        %v1048 = vcombine.high %v887, %v893
        %v1050 = vunpack.c.l.s4 1983009808
        %v1051 = vunpack.c.0.s8 %v1050
        %v1052 = vlaneseq
        %v1053 = vshrl.u32 %v1052, 7
        %v1054 = vsub.s32 %v1051, %v1053
        %v1055 = vrot.slane %v1047, %v1054
        %v1057 = vunpack.c.l.s4 1983009808
        %v1058 = vunpack.c.0.s8 %v1057
        %v1059 = vlaneseq
        %v1060 = vshrl.u32 %v1059, 7
        %v1061 = vsub.s32 %v1058, %v1060
        %v1062 = vrot.slane %v1048, %v1061
        %v1063 = vcombine.low %v1039, %v1055
        %v1064 = vcombine.high %v1039, %v1055
        %v1066 = vunpack.c.l.s4 1934713408
        %v1067 = vunpack.c.0.s8 %v1066
        %v1068 = vlaneseq
        %v1069 = vshrl.u32 %v1068, 7
        %v1070 = vsub.s32 %v1067, %v1069
        %v1071 = vrot.slane %v1063, %v1070
        %v1073 = vunpack.c.l.s4 1934713408
        %v1074 = vunpack.c.0.s8 %v1073
        %v1075 = vlaneseq
        %v1076 = vshrl.u32 %v1075, 7
        %v1077 = vsub.s32 %v1074, %v1076
        %v1078 = vrot.slane %v1064, %v1077
        %v1079 = vcombine.low %v1046, %v1062
        %v1080 = vcombine.high %v1046, %v1062
        %v1082 = vunpack.c.l.s4 1934713408
        %v1083 = vunpack.c.0.s8 %v1082
        %v1084 = vlaneseq
        %v1085 = vshrl.u32 %v1084, 7
        %v1086 = vsub.s32 %v1083, %v1085
        %v1087 = vrot.slane %v1079, %v1086
        %v1089 = vunpack.c.l.s4 1934713408
        %v1090 = vunpack.c.0.s8 %v1089
        %v1091 = vlaneseq
        %v1092 = vshrl.u32 %v1091, 7
        %v1093 = vsub.s32 %v1090, %v1092
        %v1094 = vrot.slane %v1080, %v1093
        %v1095 = vcombine.high %v1071, 0.0
        %v1096 = vcombine.high %v1078, 0.0
        %v1097 = vcombine.high %v1087, 0.0
        %v1098 = vcombine.high %v1094, 0.0
        %v1099 = vcombine.low %v1023, %v1025
        %v1100 = vcombine.high %v1023, %v1025
        %v1102 = vunpack.c.l.s4 1983009808
        %v1103 = vunpack.c.0.s8 %v1102
        %v1104 = vlaneseq
        %v1105 = vshrl.u32 %v1104, 7
        %v1106 = vsub.s32 %v1103, %v1105
        %v1107 = vrot.slane %v1099, %v1106
        %v1109 = vunpack.c.l.s4 1983009808
        %v1110 = vunpack.c.0.s8 %v1109
        %v1111 = vlaneseq
        %v1112 = vshrl.u32 %v1111, 7
        %v1113 = vsub.s32 %v1110, %v1112
        %v1114 = vrot.slane %v1100, %v1113
        %v1115 = vcombine.low %v1024, %v1026
        %v1116 = vcombine.high %v1024, %v1026
        %v1118 = vunpack.c.l.s4 1983009808
        %v1119 = vunpack.c.0.s8 %v1118
        %v1120 = vlaneseq
        %v1121 = vshrl.u32 %v1120, 7
        %v1122 = vsub.s32 %v1119, %v1121
        %v1123 = vrot.slane %v1115, %v1122
        %v1125 = vunpack.c.l.s4 1983009808
        %v1126 = vunpack.c.0.s8 %v1125
        %v1127 = vlaneseq
        %v1128 = vshrl.u32 %v1127, 7
        %v1129 = vsub.s32 %v1126, %v1128
        %v1130 = vrot.slane %v1116, %v1129
        %v1131 = vcombine.low %v1027, %v1029
        %v1132 = vcombine.high %v1027, %v1029
        %v1134 = vunpack.c.l.s4 1983009808
        %v1135 = vunpack.c.0.s8 %v1134
        %v1136 = vlaneseq
        %v1137 = vshrl.u32 %v1136, 7
        %v1138 = vsub.s32 %v1135, %v1137
        %v1139 = vrot.slane %v1131, %v1138
        %v1141 = vunpack.c.l.s4 1983009808
        %v1142 = vunpack.c.0.s8 %v1141
        %v1143 = vlaneseq
        %v1144 = vshrl.u32 %v1143, 7
        %v1145 = vsub.s32 %v1142, %v1144
        %v1146 = vrot.slane %v1132, %v1145
        %v1147 = vcombine.low %v1028, %v1030
        %v1148 = vcombine.high %v1028, %v1030
        %v1150 = vunpack.c.l.s4 1983009808
        %v1151 = vunpack.c.0.s8 %v1150
        %v1152 = vlaneseq
        %v1153 = vshrl.u32 %v1152, 7
        %v1154 = vsub.s32 %v1151, %v1153
        %v1155 = vrot.slane %v1147, %v1154
        %v1157 = vunpack.c.l.s4 1983009808
        %v1158 = vunpack.c.0.s8 %v1157
        %v1159 = vlaneseq
        %v1160 = vshrl.u32 %v1159, 7
        %v1161 = vsub.s32 %v1158, %v1160
        %v1162 = vrot.slane %v1148, %v1161
        %v1163 = vcombine.low %v1107, %v1123
        %v1164 = vcombine.high %v1107, %v1123
        %v1166 = vunpack.c.l.s4 1934713408
        %v1167 = vunpack.c.0.s8 %v1166
        %v1168 = vlaneseq
        %v1169 = vshrl.u32 %v1168, 7
        %v1170 = vsub.s32 %v1167, %v1169
        %v1171 = vrot.slane %v1163, %v1170
        %v1173 = vunpack.c.l.s4 1934713408
        %v1174 = vunpack.c.0.s8 %v1173
        %v1175 = vlaneseq
        %v1176 = vshrl.u32 %v1175, 7
        %v1177 = vsub.s32 %v1174, %v1176
        %v1178 = vrot.slane %v1164, %v1177
        %v1179 = vcombine.low %v1114, %v1130
        %v1180 = vcombine.high %v1114, %v1130
        %v1182 = vunpack.c.l.s4 1934713408
        %v1183 = vunpack.c.0.s8 %v1182
        %v1184 = vlaneseq
        %v1185 = vshrl.u32 %v1184, 7
        %v1186 = vsub.s32 %v1183, %v1185
        %v1187 = vrot.slane %v1179, %v1186
        %v1189 = vunpack.c.l.s4 1934713408
        %v1190 = vunpack.c.0.s8 %v1189
        %v1191 = vlaneseq
        %v1192 = vshrl.u32 %v1191, 7
        %v1193 = vsub.s32 %v1190, %v1192
        %v1194 = vrot.slane %v1180, %v1193
        %v1195 = vcombine.low %v1139, %v1155
        %v1196 = vcombine.high %v1139, %v1155
        %v1198 = vunpack.c.l.s4 1934713408
        %v1199 = vunpack.c.0.s8 %v1198
        %v1200 = vlaneseq
        %v1201 = vshrl.u32 %v1200, 7
        %v1202 = vsub.s32 %v1199, %v1201
        %v1203 = vrot.slane %v1195, %v1202
        %v1205 = vunpack.c.l.s4 1934713408
        %v1206 = vunpack.c.0.s8 %v1205
        %v1207 = vlaneseq
        %v1208 = vshrl.u32 %v1207, 7
        %v1209 = vsub.s32 %v1206, %v1208
        %v1210 = vrot.slane %v1196, %v1209
        %v1211 = vcombine.low %v1146, %v1162
        %v1212 = vcombine.high %v1146, %v1162
        %v1214 = vunpack.c.l.s4 1934713408
        %v1215 = vunpack.c.0.s8 %v1214
        %v1216 = vlaneseq
        %v1217 = vshrl.u32 %v1216, 7
        %v1218 = vsub.s32 %v1215, %v1217
        %v1219 = vrot.slane %v1211, %v1218
        %v1221 = vunpack.c.l.s4 1934713408
        %v1222 = vunpack.c.0.s8 %v1221
        %v1223 = vlaneseq
        %v1224 = vshrl.u32 %v1223, 7
        %v1225 = vsub.s32 %v1222, %v1224
        %v1226 = vrot.slane %v1212, %v1225
        %v1227 = vcombine.low %v1171, %v1203
        %v1228 = vcombine.high %v1171, %v1203
        %v1229 = vcombine.low %v1178, %v1210
        %v1230 = vcombine.high %v1178, %v1210
        %v1231 = vcombine.low %v1187, %v1219
        %v1232 = vcombine.high %v1187, %v1219
        %v1233 = vcombine.low %v1194, %v1226
        %v1234 = vcombine.high %v1194, %v1226
        %v1235 = vcombine.low %v1071, %v1078
        %v1237 = vunpack.c.l.s4 1983009808
        %v1238 = vunpack.c.0.s8 %v1237
        %v1239 = vlaneseq
        %v1240 = vshrl.u32 %v1239, 7
        %v1241 = vsub.s32 %v1238, %v1240
        %v1242 = vrot.slane %v1235, %v1241
        %v1243 = vcombine.low %v1095, %v1096
        %v1245 = vunpack.c.l.s4 1983009808
        %v1246 = vunpack.c.0.s8 %v1245
        %v1247 = vlaneseq
        %v1248 = vshrl.u32 %v1247, 7
        %v1249 = vsub.s32 %v1246, %v1248
        %v1250 = vrot.slane %v1243, %v1249
        %v1251 = vcombine.low %v1087, %v1094
        %v1253 = vunpack.c.l.s4 1983009808
        %v1254 = vunpack.c.0.s8 %v1253
        %v1255 = vlaneseq
        %v1256 = vshrl.u32 %v1255, 7
        %v1257 = vsub.s32 %v1254, %v1256
        %v1258 = vrot.slane %v1251, %v1257
        %v1259 = vcombine.low %v1097, %v1098
        %v1261 = vunpack.c.l.s4 1983009808
        %v1262 = vunpack.c.0.s8 %v1261
        %v1263 = vlaneseq
        %v1264 = vshrl.u32 %v1263, 7
        %v1265 = vsub.s32 %v1262, %v1264
        %v1266 = vrot.slane %v1259, %v1265
        %v1267 = vcombine.low %v1242, %v1250
        %v1268 = vcombine.high %v1242, %v1250
        %v1270 = vunpack.c.l.s4 1934713408
        %v1271 = vunpack.c.0.s8 %v1270
        %v1272 = vlaneseq
        %v1273 = vshrl.u32 %v1272, 7
        %v1274 = vsub.s32 %v1271, %v1273
        %v1275 = vrot.slane %v1267, %v1274
        %v1277 = vunpack.c.l.s4 1934713408
        %v1278 = vunpack.c.0.s8 %v1277
        %v1279 = vlaneseq
        %v1280 = vshrl.u32 %v1279, 7
        %v1281 = vsub.s32 %v1278, %v1280
        %v1282 = vrot.slane %v1268, %v1281
        %v1283 = vcombine.low %v1258, %v1266
        %v1284 = vcombine.high %v1258, %v1266
        %v1286 = vunpack.c.l.s4 1934713408
        %v1287 = vunpack.c.0.s8 %v1286
        %v1288 = vlaneseq
        %v1289 = vshrl.u32 %v1288, 7
        %v1290 = vsub.s32 %v1287, %v1289
        %v1291 = vrot.slane %v1283, %v1290
        %v1293 = vunpack.c.l.s4 1934713408
        %v1294 = vunpack.c.0.s8 %v1293
        %v1295 = vlaneseq
        %v1296 = vshrl.u32 %v1295, 7
        %v1297 = vsub.s32 %v1294, %v1296
        %v1298 = vrot.slane %v1284, %v1297
        %v1299 = vcombine.low %v1275, %v1291
        %v1300 = vcombine.high %v1275, %v1291
        %v1301 = vcombine.low %v1282, %v1298
        %v1302 = vcombine.high %v1282, %v1298
        %v1303 = vpack.c.bf16 %v1227, %v1227
        %v1304 = vpack.c.bf16 %v1228, %v1228
        %v1305 = vpack.c.bf16 %v1229, %v1229
        %v1306 = vpack.c.bf16 %v1230, %v1230
        %v1307 = vpack.c.bf16 %v1231, %v1231
        %v1308 = vpack.c.bf16 %v1232, %v1232
        %v1309 = vpack.c.bf16 %v1233, %v1233
        %v1310 = vpack.c.bf16 %v1234, %v1234
        %v1311 = vpack.c.bf16 %v1299, %v1299
        %v1312 = vpack.c.bf16 %v1300, %v1300
        %v1313 = vpack.c.bf16 %v1301, %v1301
        %v1314 = vpack.c.bf16 %v1302, %v1302
        %v1316 = vlaneseq
        %v1317 = vshrl.u32 %v1316, 7
        %v1318 = vsub.s32 0, %v1317
        %v1319 = vrot.slane %v570, %v1318
        %vm1321 = vcmask 261120
        %v1323 = vsel %vm1321, %v1303, 0
        %v1326 = vsel %vm1321, %v1307, 0
        %1328 = vmatprep.subr.bf16.mxu0 0
        %1329 = vmatpush1.bf16.xpose.msra.mxu0 %v1326
        %1330 = vmatprep.subr.bf16.mxu0 0
        %1331 = vmatpush1.bf16.xpose.msra.mxu0 0
        %1332 = vmatprep.subr.bf16.mxu0 0
        %1333 = vmatpush1.bf16.xpose.msra.mxu0 0
        %1334 = vmatprep.subr.bf16.mxu0 0
        %1335 = vmatpush1.bf16.xpose.msra.mxu0 0
        %1336 = vmatprep.subr.bf16.mxu0 0
        %1337 = vmatpush1.bf16.xpose.msra.mxu0 0
        %1338 = vmatprep.subr.bf16.mxu0 0
        %1339 = vmatpush1.bf16.xpose.msra.mxu0 0
        %1340 = vmatprep.subr.bf16.mxu0 0
        %1341 = vmatpush1.bf16.xpose.msra.mxu0 0
        %1342 = vmatprep.subr.bf16.mxu0 0
        %1343 = vmatpush1.bf16.xpose.msra.mxu0 0
        %1344 = vmatprep.subr.bf16.mxu0 0
        %1345 = vmatpush1.bf16.xpose.msra.mxu0 0
        %1346 = vmatprep.subr.bf16.mxu0 0
        %1347 = vmatpush1.bf16.xpose.msra.mxu0 0
        %1348 = vmatprep.subr.bf16.mxu0 0
        %1349 = vmatpush1.bf16.xpose.msra.mxu0 0
        %1350 = vmatprep.subr.bf16.mxu0 0
        %1351 = vmatpush1.bf16.xpose.msra.mxu0 0
        %1352 = vmatprep.subr.bf16.mxu0 0
        %1353 = vmatpush1.bf16.xpose.msra.mxu0 0
        %1354 = vmatprep.subr.bf16.mxu0 0
        %1355 = vmatpush1.bf16.xpose.msra.mxu0 0
        %1356 = vmatprep.subr.bf16.mxu0 0
        %1357 = vmatpush1.bf16.xpose.msra.mxu0 0
        %1358 = vmatprep.subr.bf16.mxu0 0
        %1359 = vmatpush1.bf16.xpose.msra.mxu0 0
        %1360 = vmatprep.mubr.bf16.mxu0 0
        %1361 = vmatmul.mubr.bf16.gmra.mrb[0].mxu0 %v1323
        %v1362 = vpop.f32.mrb[0].mxu0
        %v1363 = vadd.f32 %v1319, %v1362
        %v1364 = vpop.f32.mrb[0].mxu0
        %v1365 = vpop.f32.mrb[0].mxu0
        %v1366 = vpop.f32.mrb[0].mxu0
        %1367 = vdwg.mxu0
        %v1369 = vsel %vm1321, %v1304, 0
        %v1372 = vsel %vm1321, %v1308, 0
        %1374 = vmatprep.subr.bf16.mxu0 0
        %1375 = vmatpush1.bf16.xpose.msra.mxu0 %v1372
        %1376 = vmatprep.subr.bf16.mxu0 0
        %1377 = vmatpush1.bf16.xpose.msra.mxu0 0
        %1378 = vmatprep.subr.bf16.mxu0 0
        %1379 = vmatpush1.bf16.xpose.msra.mxu0 0
        %1380 = vmatprep.subr.bf16.mxu0 0
        %1381 = vmatpush1.bf16.xpose.msra.mxu0 0
        %1382 = vmatprep.subr.bf16.mxu0 0
        %1383 = vmatpush1.bf16.xpose.msra.mxu0 0
        %1384 = vmatprep.subr.bf16.mxu0 0
        %1385 = vmatpush1.bf16.xpose.msra.mxu0 0
        %1386 = vmatprep.subr.bf16.mxu0 0
        %1387 = vmatpush1.bf16.xpose.msra.mxu0 0
        %1388 = vmatprep.subr.bf16.mxu0 0
        %1389 = vmatpush1.bf16.xpose.msra.mxu0 0
        %1390 = vmatprep.subr.bf16.mxu0 0
        %1391 = vmatpush1.bf16.xpose.msra.mxu0 0
        %1392 = vmatprep.subr.bf16.mxu0 0
        %1393 = vmatpush1.bf16.xpose.msra.mxu0 0
        %1394 = vmatprep.subr.bf16.mxu0 0
        %1395 = vmatpush1.bf16.xpose.msra.mxu0 0
        %1396 = vmatprep.subr.bf16.mxu0 0
        %1397 = vmatpush1.bf16.xpose.msra.mxu0 0
        %1398 = vmatprep.subr.bf16.mxu0 0
        %1399 = vmatpush1.bf16.xpose.msra.mxu0 0
        %1400 = vmatprep.subr.bf16.mxu0 0
        %1401 = vmatpush1.bf16.xpose.msra.mxu0 0
        %1402 = vmatprep.subr.bf16.mxu0 0
        %1403 = vmatpush1.bf16.xpose.msra.mxu0 0
        %1404 = vmatprep.subr.bf16.mxu0 0
        %1405 = vmatpush1.bf16.xpose.msra.mxu0 0
        %1406 = vmatprep.mubr.bf16.mxu0 0
        %1407 = vmatmul.mubr.bf16.gmra.mrb[0].mxu0 %v1369
        %v1408 = vpop.f32.mrb[0].mxu0
        %v1409 = vadd.f32 %v1319, %v1408
        %v1410 = vpop.f32.mrb[0].mxu0
        %v1411 = vpop.f32.mrb[0].mxu0
        %v1412 = vpop.f32.mrb[0].mxu0
        %1413 = vdwg.mxu0
        %v1415 = vsel %vm1321, %v1305, 0
        %v1418 = vsel %vm1321, %v1309, 0
        %1420 = vmatprep.subr.bf16.mxu0 0
        %1421 = vmatpush1.bf16.xpose.msra.mxu0 %v1418
        %1422 = vmatprep.subr.bf16.mxu0 0
        %1423 = vmatpush1.bf16.xpose.msra.mxu0 0
        %1424 = vmatprep.subr.bf16.mxu0 0
        %1425 = vmatpush1.bf16.xpose.msra.mxu0 0
        %1426 = vmatprep.subr.bf16.mxu0 0
        %1427 = vmatpush1.bf16.xpose.msra.mxu0 0
        %1428 = vmatprep.subr.bf16.mxu0 0
        %1429 = vmatpush1.bf16.xpose.msra.mxu0 0
        %1430 = vmatprep.subr.bf16.mxu0 0
        %1431 = vmatpush1.bf16.xpose.msra.mxu0 0
        %1432 = vmatprep.subr.bf16.mxu0 0
        %1433 = vmatpush1.bf16.xpose.msra.mxu0 0
        %1434 = vmatprep.subr.bf16.mxu0 0
        %1435 = vmatpush1.bf16.xpose.msra.mxu0 0
        %1436 = vmatprep.subr.bf16.mxu0 0
        %1437 = vmatpush1.bf16.xpose.msra.mxu0 0
        %1438 = vmatprep.subr.bf16.mxu0 0
        %1439 = vmatpush1.bf16.xpose.msra.mxu0 0
        %1440 = vmatprep.subr.bf16.mxu0 0
        %1441 = vmatpush1.bf16.xpose.msra.mxu0 0
        %1442 = vmatprep.subr.bf16.mxu0 0
        %1443 = vmatpush1.bf16.xpose.msra.mxu0 0
        %1444 = vmatprep.subr.bf16.mxu0 0
        %1445 = vmatpush1.bf16.xpose.msra.mxu0 0
        %1446 = vmatprep.subr.bf16.mxu0 0
        %1447 = vmatpush1.bf16.xpose.msra.mxu0 0
        %1448 = vmatprep.subr.bf16.mxu0 0
        %1449 = vmatpush1.bf16.xpose.msra.mxu0 0
        %1450 = vmatprep.subr.bf16.mxu0 0
        %1451 = vmatpush1.bf16.xpose.msra.mxu0 0
        %1452 = vmatprep.mubr.bf16.mxu0 0
        %1453 = vmatmul.mubr.bf16.gmra.mrb[0].mxu0 %v1415
        %v1454 = vpop.f32.mrb[0].mxu0
        %v1455 = vadd.f32 %v1319, %v1454
        %v1456 = vpop.f32.mrb[0].mxu0
        %v1457 = vpop.f32.mrb[0].mxu0
        %v1458 = vpop.f32.mrb[0].mxu0
        %1459 = vdwg.mxu0
        %v1461 = vsel %vm1321, %v1306, 0
        %v1464 = vsel %vm1321, %v1310, 0
        %1466 = vmatprep.subr.bf16.mxu0 0
        %1467 = vmatpush1.bf16.xpose.msra.mxu0 %v1464
        %1468 = vmatprep.subr.bf16.mxu0 0
        %1469 = vmatpush1.bf16.xpose.msra.mxu0 0
        %1470 = vmatprep.subr.bf16.mxu0 0
        %1471 = vmatpush1.bf16.xpose.msra.mxu0 0
        %1472 = vmatprep.subr.bf16.mxu0 0
        %1473 = vmatpush1.bf16.xpose.msra.mxu0 0
        %1474 = vmatprep.subr.bf16.mxu0 0
        %1475 = vmatpush1.bf16.xpose.msra.mxu0 0
        %1476 = vmatprep.subr.bf16.mxu0 0
        %1477 = vmatpush1.bf16.xpose.msra.mxu0 0
        %1478 = vmatprep.subr.bf16.mxu0 0
        %1479 = vmatpush1.bf16.xpose.msra.mxu0 0
        %1480 = vmatprep.subr.bf16.mxu0 0
        %1481 = vmatpush1.bf16.xpose.msra.mxu0 0
        %1482 = vmatprep.subr.bf16.mxu0 0
        %1483 = vmatpush1.bf16.xpose.msra.mxu0 0
        %1484 = vmatprep.subr.bf16.mxu0 0
        %1485 = vmatpush1.bf16.xpose.msra.mxu0 0
        %1486 = vmatprep.subr.bf16.mxu0 0
        %1487 = vmatpush1.bf16.xpose.msra.mxu0 0
        %1488 = vmatprep.subr.bf16.mxu0 0
        %1489 = vmatpush1.bf16.xpose.msra.mxu0 0
        %1490 = vmatprep.subr.bf16.mxu0 0
        %1491 = vmatpush1.bf16.xpose.msra.mxu0 0
        %1492 = vmatprep.subr.bf16.mxu0 0
        %1493 = vmatpush1.bf16.xpose.msra.mxu0 0
        %1494 = vmatprep.subr.bf16.mxu0 0
        %1495 = vmatpush1.bf16.xpose.msra.mxu0 0
        %1496 = vmatprep.subr.bf16.mxu0 0
        %1497 = vmatpush1.bf16.xpose.msra.mxu0 0
        %1498 = vmatprep.mubr.bf16.mxu0 0
        %1499 = vmatmul.mubr.bf16.gmra.mrb[0].mxu0 %v1461
        %v1500 = vpop.f32.mrb[0].mxu0
        %v1501 = vadd.f32 %v1319, %v1500
        %v1502 = vpop.f32.mrb[0].mxu0
        %v1503 = vpop.f32.mrb[0].mxu0
        %v1504 = vpop.f32.mrb[0].mxu0
        %1505 = vdwg.mxu0
        %vm1506 = vcmask 64512
        %v1507 = vsel %vm1506, %v1363, -inf
        %1508 = vmax.xlane.f32.xlu0 %v1507
        %v1509 = vpop.xlane.xlu0 %1508
        %v1510 = vsel %vm1506, %v1409, -inf
        %1511 = vmax.xlane.f32.xlu0 %v1510
        %v1512 = vpop.xlane.xlu0 %1511
        %v1513 = vsel %vm1506, %v1455, -inf
        %1514 = vmax.xlane.f32.xlu0 %v1513
        %v1515 = vpop.xlane.xlu0 %1514
        %v1516 = vsel %vm1506, %v1501, -inf
        %1517 = vmax.xlane.f32.xlu0 %v1516
        %v1518 = vpop.xlane.xlu0 %1517
        %v1519 = vsub.f32 %v1363, %v1509
        %v1520 = vsub.f32 %v1409, %v1512
        %v1521 = vsub.f32 %v1455, %v1515
        %v1522 = vsub.f32 %v1501, %v1518
        %v1523 = vmul.f32 %v1519, 1.442695
        %v1524 = vpow.pop %v1523
        %v1525 = vmul.f32 %v1520, 1.442695
        %v1526 = vpow.pop %v1525
        %v1527 = vmul.f32 %v1521, 1.442695
        %v1528 = vpow.pop %v1527
        %v1529 = vmul.f32 %v1522, 1.442695
        %v1530 = vpow.pop %v1529
        %v1531 = vsel %vm1506, %v1524, 0.0
        %1532 = vadd.xlane.f32.xlu0 %v1531
        %v1533 = vpop.xlane.xlu0 %1532
        %v1534 = vsel %vm1506, %v1526, 0.0
        %1535 = vadd.xlane.f32.xlu0 %v1534
        %v1536 = vpop.xlane.xlu0 %1535
        %v1537 = vsel %vm1506, %v1528, 0.0
        %1538 = vadd.xlane.f32.xlu0 %v1537
        %v1539 = vpop.xlane.xlu0 %1538
        %v1540 = vsel %vm1506, %v1530, 0.0
        %1541 = vadd.xlane.f32.xlu0 %v1540
        %v1542 = vpop.xlane.xlu0 %1541
        %v1543 = vrcp.pop %v1533
        %v1544 = vrcp.pop %v1536
        %v1545 = vrcp.pop %v1539
        %v1546 = vrcp.pop %v1542
        %v1547 = vmul.f32 %v1524, %v1543
        %v1548 = vmul.f32 %v1526, %v1544
        %v1549 = vmul.f32 %v1528, %v1545
        %v1550 = vmul.f32 %v1530, %v1546
        %v1551 = vpack.c.bf16 %v1547, %v1547
        %v1552 = vpack.c.bf16 %v1548, %v1548
        %v1553 = vpack.c.bf16 %v1549, %v1549
        %v1554 = vpack.c.bf16 %v1550, %v1550
        %v1556 = vsel %vm1506, %v1551, 0
        %vm1558 = vcmask 1043456
        %v1560 = vsel %vm1558, %v1311, 0
        %1562 = vmatprep.subr.bf16.mxu0 0
        %1563 = vmatpush1.bf16.msra.mxu0 %v1560
        %1564 = vmatprep.subr.bf16.mxu0 0
        %1565 = vmatpush1.bf16.msra.mxu0 0
        %1566 = vmatprep.subr.bf16.mxu0 0
        %1567 = vmatpush1.bf16.msra.mxu0 0
        %1568 = vmatprep.subr.bf16.mxu0 0
        %1569 = vmatpush1.bf16.msra.mxu0 0
        %1570 = vmatprep.subr.bf16.mxu0 0
        %1571 = vmatpush1.bf16.msra.mxu0 0
        %1572 = vmatprep.subr.bf16.mxu0 0
        %1573 = vmatpush1.bf16.msra.mxu0 0
        %1574 = vmatprep.subr.bf16.mxu0 0
        %1575 = vmatpush1.bf16.msra.mxu0 0
        %1576 = vmatprep.subr.bf16.mxu0 0
        %1577 = vmatpush1.bf16.msra.mxu0 0
        %1578 = vmatprep.subr.bf16.mxu0 0
        %1579 = vmatpush1.bf16.msra.mxu0 0
        %1580 = vmatprep.subr.bf16.mxu0 0
        %1581 = vmatpush1.bf16.msra.mxu0 0
        %1582 = vmatprep.subr.bf16.mxu0 0
        %1583 = vmatpush1.bf16.msra.mxu0 0
        %1584 = vmatprep.subr.bf16.mxu0 0
        %1585 = vmatpush1.bf16.msra.mxu0 0
        %1586 = vmatprep.subr.bf16.mxu0 0
        %1587 = vmatpush1.bf16.msra.mxu0 0
        %1588 = vmatprep.subr.bf16.mxu0 0
        %1589 = vmatpush1.bf16.msra.mxu0 0
        %1590 = vmatprep.subr.bf16.mxu0 0
        %1591 = vmatpush1.bf16.msra.mxu0 0
        %1592 = vmatprep.subr.bf16.mxu0 0
        %1593 = vmatpush1.bf16.msra.mxu0 0
        %1594 = vmatprep.mubr.bf16.mxu0 0
        %1595 = vmatmul.mubr.bf16.gmra.mrb[0].mxu0 %v1556
        %v1596 = vpop.f32.mrb[0].mxu0
        %v1597 = vadd.f32 0.0, %v1596
        %v1598 = vpop.f32.mrb[0].mxu0
        %v1599 = vpop.f32.mrb[0].mxu0
        %v1600 = vpop.f32.mrb[0].mxu0
        %1601 = vdwg.mxu0
        %v1603 = vsel %vm1506, %v1552, 0
        %v1606 = vsel %vm1558, %v1312, 0
        %1608 = vmatprep.subr.bf16.mxu0 0
        %1609 = vmatpush1.bf16.msra.mxu0 %v1606
        %1610 = vmatprep.subr.bf16.mxu0 0
        %1611 = vmatpush1.bf16.msra.mxu0 0
        %1612 = vmatprep.subr.bf16.mxu0 0
        %1613 = vmatpush1.bf16.msra.mxu0 0
        %1614 = vmatprep.subr.bf16.mxu0 0
        %1615 = vmatpush1.bf16.msra.mxu0 0
        %1616 = vmatprep.subr.bf16.mxu0 0
        %1617 = vmatpush1.bf16.msra.mxu0 0
        %1618 = vmatprep.subr.bf16.mxu0 0
        %1619 = vmatpush1.bf16.msra.mxu0 0
        %1620 = vmatprep.subr.bf16.mxu0 0
        %1621 = vmatpush1.bf16.msra.mxu0 0
        %1622 = vmatprep.subr.bf16.mxu0 0
        %1623 = vmatpush1.bf16.msra.mxu0 0
        %1624 = vmatprep.subr.bf16.mxu0 0
        %1625 = vmatpush1.bf16.msra.mxu0 0
        %1626 = vmatprep.subr.bf16.mxu0 0
        %1627 = vmatpush1.bf16.msra.mxu0 0
        %1628 = vmatprep.subr.bf16.mxu0 0
        %1629 = vmatpush1.bf16.msra.mxu0 0
        %1630 = vmatprep.subr.bf16.mxu0 0
        %1631 = vmatpush1.bf16.msra.mxu0 0
        %1632 = vmatprep.subr.bf16.mxu0 0
        %1633 = vmatpush1.bf16.msra.mxu0 0
        %1634 = vmatprep.subr.bf16.mxu0 0
        %1635 = vmatpush1.bf16.msra.mxu0 0
        %1636 = vmatprep.subr.bf16.mxu0 0
        %1637 = vmatpush1.bf16.msra.mxu0 0
        %1638 = vmatprep.subr.bf16.mxu0 0
        %1639 = vmatpush1.bf16.msra.mxu0 0
        %1640 = vmatprep.mubr.bf16.mxu0 0
        %1641 = vmatmul.mubr.bf16.gmra.mrb[0].mxu0 %v1603
        %v1642 = vpop.f32.mrb[0].mxu0
        %v1643 = vadd.f32 0.0, %v1642
        %v1644 = vpop.f32.mrb[0].mxu0
        %v1645 = vpop.f32.mrb[0].mxu0
        %v1646 = vpop.f32.mrb[0].mxu0
        %1647 = vdwg.mxu0
        %v1649 = vsel %vm1506, %v1553, 0
        %v1652 = vsel %vm1558, %v1313, 0
        %1654 = vmatprep.subr.bf16.mxu0 0
        %1655 = vmatpush1.bf16.msra.mxu0 %v1652
        %1656 = vmatprep.subr.bf16.mxu0 0
        %1657 = vmatpush1.bf16.msra.mxu0 0
        %1658 = vmatprep.subr.bf16.mxu0 0
        %1659 = vmatpush1.bf16.msra.mxu0 0
        %1660 = vmatprep.subr.bf16.mxu0 0
        %1661 = vmatpush1.bf16.msra.mxu0 0
        %1662 = vmatprep.subr.bf16.mxu0 0
        %1663 = vmatpush1.bf16.msra.mxu0 0
        %1664 = vmatprep.subr.bf16.mxu0 0
        %1665 = vmatpush1.bf16.msra.mxu0 0
        %1666 = vmatprep.subr.bf16.mxu0 0
        %1667 = vmatpush1.bf16.msra.mxu0 0
        %1668 = vmatprep.subr.bf16.mxu0 0
        %1669 = vmatpush1.bf16.msra.mxu0 0
        %1670 = vmatprep.subr.bf16.mxu0 0
        %1671 = vmatpush1.bf16.msra.mxu0 0
        %1672 = vmatprep.subr.bf16.mxu0 0
        %1673 = vmatpush1.bf16.msra.mxu0 0
        %1674 = vmatprep.subr.bf16.mxu0 0
        %1675 = vmatpush1.bf16.msra.mxu0 0
        %1676 = vmatprep.subr.bf16.mxu0 0
        %1677 = vmatpush1.bf16.msra.mxu0 0
        %1678 = vmatprep.subr.bf16.mxu0 0
        %1679 = vmatpush1.bf16.msra.mxu0 0
        %1680 = vmatprep.subr.bf16.mxu0 0
        %1681 = vmatpush1.bf16.msra.mxu0 0
        %1682 = vmatprep.subr.bf16.mxu0 0
        %1683 = vmatpush1.bf16.msra.mxu0 0
        %1684 = vmatprep.subr.bf16.mxu0 0
        %1685 = vmatpush1.bf16.msra.mxu0 0
        %1686 = vmatprep.mubr.bf16.mxu0 0
        %1687 = vmatmul.mubr.bf16.gmra.mrb[0].mxu0 %v1649
        %v1688 = vpop.f32.mrb[0].mxu0
        %v1689 = vadd.f32 0.0, %v1688
        %v1690 = vpop.f32.mrb[0].mxu0
        %v1691 = vpop.f32.mrb[0].mxu0
        %v1692 = vpop.f32.mrb[0].mxu0
        %1693 = vdwg.mxu0
        %v1695 = vsel %vm1506, %v1554, 0
        %v1698 = vsel %vm1558, %v1314, 0
        %1700 = vmatprep.subr.bf16.mxu0 0
        %1701 = vmatpush1.bf16.msra.mxu0 %v1698
        %1702 = vmatprep.subr.bf16.mxu0 0
        %1703 = vmatpush1.bf16.msra.mxu0 0
        %1704 = vmatprep.subr.bf16.mxu0 0
        %1705 = vmatpush1.bf16.msra.mxu0 0
        %1706 = vmatprep.subr.bf16.mxu0 0
        %1707 = vmatpush1.bf16.msra.mxu0 0
        %1708 = vmatprep.subr.bf16.mxu0 0
        %1709 = vmatpush1.bf16.msra.mxu0 0
        %1710 = vmatprep.subr.bf16.mxu0 0
        %1711 = vmatpush1.bf16.msra.mxu0 0
        %1712 = vmatprep.subr.bf16.mxu0 0
        %1713 = vmatpush1.bf16.msra.mxu0 0
        %1714 = vmatprep.subr.bf16.mxu0 0
        %1715 = vmatpush1.bf16.msra.mxu0 0
        %1716 = vmatprep.subr.bf16.mxu0 0
        %1717 = vmatpush1.bf16.msra.mxu0 0
        %1718 = vmatprep.subr.bf16.mxu0 0
        %1719 = vmatpush1.bf16.msra.mxu0 0
        %1720 = vmatprep.subr.bf16.mxu0 0
        %1721 = vmatpush1.bf16.msra.mxu0 0
        %1722 = vmatprep.subr.bf16.mxu0 0
        %1723 = vmatpush1.bf16.msra.mxu0 0
        %1724 = vmatprep.subr.bf16.mxu0 0
        %1725 = vmatpush1.bf16.msra.mxu0 0
        %1726 = vmatprep.subr.bf16.mxu0 0
        %1727 = vmatpush1.bf16.msra.mxu0 0
        %1728 = vmatprep.subr.bf16.mxu0 0
        %1729 = vmatpush1.bf16.msra.mxu0 0
        %1730 = vmatprep.subr.bf16.mxu0 0
        %1731 = vmatpush1.bf16.msra.mxu0 0
        %1732 = vmatprep.mubr.bf16.mxu0 0
        %1733 = vmatmul.mubr.bf16.gmra.mrb[0].mxu0 %v1695
        %v1734 = vpop.f32.mrb[0].mxu0
        %v1735 = vadd.f32 0.0, %v1734
        %v1736 = vpop.f32.mrb[0].mxu0
        %v1737 = vpop.f32.mrb[0].mxu0
        %v1738 = vpop.f32.mrb[0].mxu0
        %1739 = vdwg.mxu0
        %v1740 = vcombine.low %v1597, %v1689
        %v1741 = vcombine.high %v1597, %v1689
        %v1743 = vunpack.c.l.s4 1983009808
        %v1744 = vunpack.c.0.s8 %v1743
        %v1745 = vlaneseq
        %v1746 = vshrl.u32 %v1745, 7
        %v1747 = vsub.s32 %v1744, %v1746
        %v1748 = vrot.slane %v1740, %v1747
        %v1750 = vunpack.c.l.s4 1983009808
        %v1751 = vunpack.c.0.s8 %v1750
        %v1752 = vlaneseq
        %v1753 = vshrl.u32 %v1752, 7
        %v1754 = vsub.s32 %v1751, %v1753
        %v1755 = vrot.slane %v1741, %v1754
        %v1756 = vcombine.low %v1643, %v1735
        %v1757 = vcombine.high %v1643, %v1735
        %v1759 = vunpack.c.l.s4 1983009808
        %v1760 = vunpack.c.0.s8 %v1759
        %v1761 = vlaneseq
        %v1762 = vshrl.u32 %v1761, 7
        %v1763 = vsub.s32 %v1760, %v1762
        %v1764 = vrot.slane %v1756, %v1763
        %v1766 = vunpack.c.l.s4 1983009808
        %v1767 = vunpack.c.0.s8 %v1766
        %v1768 = vlaneseq
        %v1769 = vshrl.u32 %v1768, 7
        %v1770 = vsub.s32 %v1767, %v1769
        %v1771 = vrot.slane %v1757, %v1770
        %v1772 = vcombine.low %v1748, %v1764
        %v1773 = vcombine.high %v1748, %v1764
        %v1775 = vunpack.c.l.s4 1934713408
        %v1776 = vunpack.c.0.s8 %v1775
        %v1777 = vlaneseq
        %v1778 = vshrl.u32 %v1777, 7
        %v1779 = vsub.s32 %v1776, %v1778
        %v1780 = vrot.slane %v1772, %v1779
        %v1782 = vunpack.c.l.s4 1934713408
        %v1783 = vunpack.c.0.s8 %v1782
        %v1784 = vlaneseq
        %v1785 = vshrl.u32 %v1784, 7
        %v1786 = vsub.s32 %v1783, %v1785
        %v1787 = vrot.slane %v1773, %v1786
        %v1788 = vcombine.low %v1755, %v1771
        %v1789 = vcombine.high %v1755, %v1771
        %v1791 = vunpack.c.l.s4 1934713408
        %v1792 = vunpack.c.0.s8 %v1791
        %v1793 = vlaneseq
        %v1794 = vshrl.u32 %v1793, 7
        %v1795 = vsub.s32 %v1792, %v1794
        %v1796 = vrot.slane %v1788, %v1795
        %v1798 = vunpack.c.l.s4 1934713408
        %v1799 = vunpack.c.0.s8 %v1798
        %v1800 = vlaneseq
        %v1801 = vshrl.u32 %v1800, 7
        %v1802 = vsub.s32 %v1799, %v1801
        %v1803 = vrot.slane %v1789, %v1802
        %v1804 = vcombine.high %v1780, 0.0
        %v1805 = vcombine.high %v1787, 0.0
        %v1806 = vcombine.high %v1796, 0.0
        %v1807 = vcombine.high %v1803, 0.0
        %v1808 = vcombine.low %v1780, %v1787
        %v1810 = vunpack.c.l.s4 1983009808
        %v1811 = vunpack.c.0.s8 %v1810
        %v1812 = vlaneseq
        %v1813 = vshrl.u32 %v1812, 7
        %v1814 = vsub.s32 %v1811, %v1813
        %v1815 = vrot.slane %v1808, %v1814
        %v1816 = vcombine.low %v1804, %v1805
        %v1818 = vunpack.c.l.s4 1983009808
        %v1819 = vunpack.c.0.s8 %v1818
        %v1820 = vlaneseq
        %v1821 = vshrl.u32 %v1820, 7
        %v1822 = vsub.s32 %v1819, %v1821
        %v1823 = vrot.slane %v1816, %v1822
        %v1824 = vcombine.low %v1796, %v1803
        %v1826 = vunpack.c.l.s4 1983009808
        %v1827 = vunpack.c.0.s8 %v1826
        %v1828 = vlaneseq
        %v1829 = vshrl.u32 %v1828, 7
        %v1830 = vsub.s32 %v1827, %v1829
        %v1831 = vrot.slane %v1824, %v1830
        %v1832 = vcombine.low %v1806, %v1807
        %v1834 = vunpack.c.l.s4 1983009808
        %v1835 = vunpack.c.0.s8 %v1834
        %v1836 = vlaneseq
        %v1837 = vshrl.u32 %v1836, 7
        %v1838 = vsub.s32 %v1835, %v1837
        %v1839 = vrot.slane %v1832, %v1838
        %v1840 = vcombine.low %v1815, %v1823
        %v1841 = vcombine.high %v1815, %v1823
        %v1843 = vunpack.c.l.s4 1934713408
        %v1844 = vunpack.c.0.s8 %v1843
        %v1845 = vlaneseq
        %v1846 = vshrl.u32 %v1845, 7
        %v1847 = vsub.s32 %v1844, %v1846
        %v1848 = vrot.slane %v1840, %v1847
        %v1850 = vunpack.c.l.s4 1934713408
        %v1851 = vunpack.c.0.s8 %v1850
        %v1852 = vlaneseq
        %v1853 = vshrl.u32 %v1852, 7
        %v1854 = vsub.s32 %v1851, %v1853
        %v1855 = vrot.slane %v1841, %v1854
        %v1856 = vcombine.low %v1831, %v1839
        %v1857 = vcombine.high %v1831, %v1839
        %v1859 = vunpack.c.l.s4 1934713408
        %v1860 = vunpack.c.0.s8 %v1859
        %v1861 = vlaneseq
        %v1862 = vshrl.u32 %v1861, 7
        %v1863 = vsub.s32 %v1860, %v1862
        %v1864 = vrot.slane %v1856, %v1863
        %v1866 = vunpack.c.l.s4 1934713408
        %v1867 = vunpack.c.0.s8 %v1866
        %v1868 = vlaneseq
        %v1869 = vshrl.u32 %v1868, 7
        %v1870 = vsub.s32 %v1867, %v1869
        %v1871 = vrot.slane %v1857, %v1870
        %v1872 = vcombine.low %v1848, %v1864
        %v1873 = vcombine.high %v1848, %v1864
        %v1874 = vcombine.low %v1855, %v1871
        %v1875 = vcombine.high %v1855, %v1871
        %1877 = vrot.lane.b32.xlu0 %v1873, 32
        %v1878 = vpop.permute.xlu0 %1877
        %1881 = vrot.lane.b32.xlu0 %v1874, 64
        %v1882 = vpop.permute.xlu0 %1881
        %1885 = vrot.lane.b32.xlu0 %v1875, 96
        %v1886 = vpop.permute.xlu0 %1885
        %v1888 = vsel %vm1321, %v1872, %v1878
        %vm1889 = vcmask 523264
        %v1890 = vsel %vm1889, %v1888, %v1882
        %vm1891 = vcmask 785408
        %v1892 = vsel %vm1891, %v1890, %v1886
        %v1893 = vpack.c.bf16 %v1892, %v1892
        %v1894 = vld [vmem:[#allocation8] sm:$0xf]
        %v1895 = vld [vmem:[#allocation8 + $0x4] sm:$0xf]
        %v1896 = vld [vmem:[#allocation8 + $0x8] sm:$0xf]
        %v1897 = vld [vmem:[#allocation8 + $0xc] sm:$0xf]
        %v1898 = vld [vmem:[#allocation8 + $0x10] sm:$0xf]
        %v1899 = vld [vmem:[#allocation8 + $0x14] sm:$0xf]
        %v1900 = vld [vmem:[#allocation8 + $0x18] sm:$0xf]
        %v1901 = vld [vmem:[#allocation8 + $0x1c] sm:$0xf]
        %v1902 = vld [vmem:[#allocation8 + $0x20] sm:$0xf]
        %v1903 = vld [vmem:[#allocation8 + $0x24] sm:$0xf]
        %v1904 = vld [vmem:[#allocation8 + $0x28] sm:$0xf]
        %v1905 = vld [vmem:[#allocation8 + $0x2c] sm:$0xf]
        %v1906 = vld [vmem:[#allocation8 + $0x30] sm:$0xf]
        %v1907 = vld [vmem:[#allocation8 + $0x34] sm:$0xf]
        %v1908 = vld [vmem:[#allocation8 + $0x38] sm:$0xf]
        %v1909 = vld [vmem:[#allocation8 + $0x3c] sm:$0xf]
        %v1926 = vunpack.c.l.b16 %v1894
        %v1927 = vunpack.c.l.b16 %v1895
        %v1928 = vunpack.c.l.b16 %v1896
        %v1929 = vunpack.c.l.b16 %v1897
        %v1930 = vunpack.c.l.b16 %v1898
        %v1931 = vunpack.c.l.b16 %v1899
        %v1932 = vunpack.c.l.b16 %v1900
        %v1933 = vunpack.c.l.b16 %v1901
        %v1934 = vunpack.c.l.b16 %v1902
        %v1935 = vunpack.c.l.b16 %v1903
        %v1936 = vunpack.c.l.b16 %v1904
        %v1937 = vunpack.c.l.b16 %v1905
        %v1938 = vunpack.c.l.b16 %v1906
        %v1939 = vunpack.c.l.b16 %v1907
        %v1940 = vunpack.c.l.b16 %v1908
        %v1941 = vunpack.c.l.b16 %v1909
        %v1942 = vpack.c.b16 %v1927, %v1926
        %v1943 = vpack.c.b16 %v1929, %v1928
        %v1944 = vpack.c.b16 %v1931, %v1930
        %v1945 = vpack.c.b16 %v1933, %v1932
        %v1946 = vpack.c.b16 %v1935, %v1934
        %v1947 = vpack.c.b16 %v1937, %v1936
        %v1948 = vpack.c.b16 %v1939, %v1938
        %v1949 = vpack.c.b16 %v1941, %v1940
        %1958 = vmatprep.subr.bf16.mxu0 0
        %1959 = vmatpush1.bf16.msra.mxu0 %v1942
        %1960 = vmatprep.subr.bf16.mxu0 0
        %1961 = vmatpush1.bf16.msra.mxu0 %v1943
        %1962 = vmatprep.subr.bf16.mxu0 0
        %1963 = vmatpush1.bf16.msra.mxu0 %v1944
        %1964 = vmatprep.subr.bf16.mxu0 0
        %1965 = vmatpush1.bf16.msra.mxu0 %v1945
        %1966 = vmatprep.subr.bf16.mxu0 0
        %1967 = vmatpush1.bf16.msra.mxu0 %v1946
        %1968 = vmatprep.subr.bf16.mxu0 0
        %1969 = vmatpush1.bf16.msra.mxu0 %v1947
        %1970 = vmatprep.subr.bf16.mxu0 0
        %1971 = vmatpush1.bf16.msra.mxu0 %v1948
        %1972 = vmatprep.subr.bf16.mxu0 0
        %1973 = vmatpush1.bf16.msra.mxu0 %v1949
        %1974 = vmatprep.subr.bf16.mxu0 0
        %1975 = vmatpush1.bf16.msra.mxu0 0
        %1976 = vmatprep.subr.bf16.mxu0 0
        %1977 = vmatpush1.bf16.msra.mxu0 0
        %1978 = vmatprep.subr.bf16.mxu0 0
        %1979 = vmatpush1.bf16.msra.mxu0 0
        %1980 = vmatprep.subr.bf16.mxu0 0
        %1981 = vmatpush1.bf16.msra.mxu0 0
        %1982 = vmatprep.subr.bf16.mxu0 0
        %1983 = vmatpush1.bf16.msra.mxu0 0
        %1984 = vmatprep.subr.bf16.mxu0 0
        %1985 = vmatpush1.bf16.msra.mxu0 0
        %1986 = vmatprep.subr.bf16.mxu0 0
        %1987 = vmatpush1.bf16.msra.mxu0 0
        %1988 = vmatprep.subr.bf16.mxu0 0
        %1989 = vmatpush1.bf16.msra.mxu0 0
        %1990 = vmatprep.mubr.bf16.mxu0 0
        %1991 = vmatmul.mubr.bf16.gmra.mrb[0].mxu0 %v1893
        %v1992 = vpop.f32.mrb[0].mxu0
        %v1993 = vadd.f32 0.0, %v1992
        %v1994 = vpop.f32.mrb[0].mxu0
        %v1995 = vpop.f32.mrb[0].mxu0
        %v1996 = vpop.f32.mrb[0].mxu0
        %1997 = vdwg.mxu0
        %v1998 = vadd.f32 %v569, %v1993
        %v1999 = vld [vmem:[%s7] sm:$0x1]
        %v2001 = vlaneseq
        %v2002 = vshrl.u32 %v2001, 7
        %v2003 = vsub.s32 0, %v2002
        %v2004 = vrot.slane %v1999, %v2003
        %v2006 = vadd.f32 %v1998, %v2004
        %v2007 = vld [vmem:[%s8] sm:$0x1]
        %v2008 = vld [vmem:[%s9] sm:$0x1]
        %2009 = vadd.xlane.f32.xlu0 %v2006
        %v2010 = vpop.xlane.xlu0 %2009
        %v2011 = vmul.f32 %v2010, %v575
        %v2012 = vsub.f32 %v2006, %v2011
        %v2013 = vmul.f32 %v2012, %v2012
        %2014 = vadd.xlane.f32.xlu0 %v2013
        %v2015 = vpop.xlane.xlu0 %2014
        %v2016 = vmul.f32 %v2015, 0.007874016
        %v2017 = vrsqrt.pop %v2016
        %v2018 = vmul.f32 %v2016, %v2017
        %vm2019 = vcmp.eq.f32.partialorder %v2016, inf
        %v2020 = vsel %vm2019, %v2016, %v2018
        %vm2021 = vcmp.eq.f32.partialorder %v2016, 0.0
        %v2022 = vand.u32 %v2016, 2147483648
        %v2023 = vsel %vm2021, %v2022, %v2020
        %v2024 = vadd.f32 %v2023, 1e-06
        %v2025 = vrcp.pop %v2024
        %v2026 = vmul.f32 %v2012, %v2025
        %v2028 = vlaneseq
        %v2029 = vshrl.u32 %v2028, 7
        %v2030 = vsub.s32 0, %v2029
        %v2031 = vrot.slane %v2007, %v2030
        %v2033 = vmul.f32 %v2031, %v2026
        %v2035 = vlaneseq
        %v2036 = vshrl.u32 %v2035, 7
        %v2037 = vsub.s32 0, %v2036
        %v2038 = vrot.slane %v2008, %v2037
        %v2040 = vadd.f32 %v2033, %v2038
        %v2041 = vpack.c.bf16 %v2040, %v2040
        %v2042 = vld [vmem:[#allocation10] sm:$0xff]
        %v2043 = vld [vmem:[#allocation10 + $0x8] sm:$0xff]
        %v2044 = vld [vmem:[#allocation10 + $0x10] sm:$0xff]
        %v2045 = vld [vmem:[#allocation10 + $0x18] sm:$0xff]
        %v2046 = vld [vmem:[#allocation10 + $0x20] sm:$0xff]
        %v2047 = vld [vmem:[#allocation10 + $0x28] sm:$0xff]
        %v2048 = vld [vmem:[#allocation10 + $0x30] sm:$0xff]
        %v2049 = vld [vmem:[#allocation10 + $0x38] sm:$0xff]
        %v2050 = vld [vmem:[#allocation10 + $0x40] sm:$0xff]
        %v2051 = vld [vmem:[#allocation10 + $0x48] sm:$0xff]
        %v2052 = vld [vmem:[#allocation10 + $0x50] sm:$0xff]
        %v2053 = vld [vmem:[#allocation10 + $0x58] sm:$0xff]
        %v2054 = vld [vmem:[#allocation10 + $0x60] sm:$0xff]
        %v2055 = vld [vmem:[#allocation10 + $0x68] sm:$0xff]
        %v2056 = vld [vmem:[#allocation10 + $0x70] sm:$0xff]
        %v2057 = vld [vmem:[#allocation10 + $0x78] sm:$0xff]
        %v2058 = vld [vmem:[%s11] sm:$0x3]
        %v2060 = vlaneseq
        %v2061 = vshrl.u32 %v2060, 7
        %v2062 = vsub.s32 0, %v2061
        %v2063 = vrot.slane %v2058, %v2062
        %v2064 = vlaneseq
        %v2065 = vshrl.u32 %v2064, 7
        %v2066 = vsub.s32 1, %v2065
        %v2067 = vrot.slane %v2058, %v2066
        %v2086 = vunpack.c.l.b16 %v2042
        %v2087 = vunpack.c.h.b16 %v2042
        %v2088 = vunpack.c.l.b16 %v2043
        %v2089 = vunpack.c.h.b16 %v2043
        %v2090 = vunpack.c.l.b16 %v2044
        %v2091 = vunpack.c.h.b16 %v2044
        %v2092 = vunpack.c.l.b16 %v2045
        %v2093 = vunpack.c.h.b16 %v2045
        %v2094 = vunpack.c.l.b16 %v2046
        %v2095 = vunpack.c.h.b16 %v2046
        %v2096 = vunpack.c.l.b16 %v2047
        %v2097 = vunpack.c.h.b16 %v2047
        %v2098 = vunpack.c.l.b16 %v2048
        %v2099 = vunpack.c.h.b16 %v2048
        %v2100 = vunpack.c.l.b16 %v2049
        %v2101 = vunpack.c.h.b16 %v2049
        %v2102 = vunpack.c.l.b16 %v2050
        %v2103 = vunpack.c.h.b16 %v2050
        %v2104 = vunpack.c.l.b16 %v2051
        %v2105 = vunpack.c.h.b16 %v2051
        %v2106 = vunpack.c.l.b16 %v2052
        %v2107 = vunpack.c.h.b16 %v2052
        %v2108 = vunpack.c.l.b16 %v2053
        %v2109 = vunpack.c.h.b16 %v2053
        %v2110 = vunpack.c.l.b16 %v2054
        %v2111 = vunpack.c.h.b16 %v2054
        %v2112 = vunpack.c.l.b16 %v2055
        %v2113 = vunpack.c.h.b16 %v2055
        %v2114 = vunpack.c.l.b16 %v2056
        %v2115 = vunpack.c.h.b16 %v2056
        %v2116 = vunpack.c.l.b16 %v2057
        %v2117 = vunpack.c.h.b16 %v2057
        %v2118 = vpack.c.b16 %v2088, %v2086
        %v2119 = vpack.c.b16 %v2089, %v2087
        %v2120 = vpack.c.b16 %v2092, %v2090
        %v2121 = vpack.c.b16 %v2093, %v2091
        %v2122 = vpack.c.b16 %v2096, %v2094
        %v2123 = vpack.c.b16 %v2097, %v2095
        %v2124 = vpack.c.b16 %v2100, %v2098
        %v2125 = vpack.c.b16 %v2101, %v2099
        %v2126 = vpack.c.b16 %v2104, %v2102
        %v2127 = vpack.c.b16 %v2105, %v2103
        %v2128 = vpack.c.b16 %v2108, %v2106
        %v2129 = vpack.c.b16 %v2109, %v2107
        %v2130 = vpack.c.b16 %v2112, %v2110
        %v2131 = vpack.c.b16 %v2113, %v2111
        %v2132 = vpack.c.b16 %v2116, %v2114
        %v2133 = vpack.c.b16 %v2117, %v2115
        %2150 = vmatprep.subr.bf16.mxu0 %v2119
        %2151 = vmatpush1.bf16.msra.mxu0 %v2118
        %2152 = vmatprep.subr.bf16.mxu0 %v2121
        %2153 = vmatpush1.bf16.msra.mxu0 %v2120
        %2154 = vmatprep.subr.bf16.mxu0 %v2123
        %2155 = vmatpush1.bf16.msra.mxu0 %v2122
        %2156 = vmatprep.subr.bf16.mxu0 %v2125
        %2157 = vmatpush1.bf16.msra.mxu0 %v2124
        %2158 = vmatprep.subr.bf16.mxu0 %v2127
        %2159 = vmatpush1.bf16.msra.mxu0 %v2126
        %2160 = vmatprep.subr.bf16.mxu0 %v2129
        %2161 = vmatpush1.bf16.msra.mxu0 %v2128
        %2162 = vmatprep.subr.bf16.mxu0 %v2131
        %2163 = vmatpush1.bf16.msra.mxu0 %v2130
        %2164 = vmatprep.subr.bf16.mxu0 %v2133
        %2165 = vmatpush1.bf16.msra.mxu0 %v2132
        %2166 = vmatprep.subr.bf16.mxu0 0
        %2167 = vmatpush1.bf16.msra.mxu0 0
        %2168 = vmatprep.subr.bf16.mxu0 0
        %2169 = vmatpush1.bf16.msra.mxu0 0
        %2170 = vmatprep.subr.bf16.mxu0 0
        %2171 = vmatpush1.bf16.msra.mxu0 0
        %2172 = vmatprep.subr.bf16.mxu0 0
        %2173 = vmatpush1.bf16.msra.mxu0 0
        %2174 = vmatprep.subr.bf16.mxu0 0
        %2175 = vmatpush1.bf16.msra.mxu0 0
        %2176 = vmatprep.subr.bf16.mxu0 0
        %2177 = vmatpush1.bf16.msra.mxu0 0
        %2178 = vmatprep.subr.bf16.mxu0 0
        %2179 = vmatpush1.bf16.msra.mxu0 0
        %2180 = vmatprep.subr.bf16.mxu0 0
        %2181 = vmatpush1.bf16.msra.mxu0 0
        %2182 = vmatprep.mubr.bf16.mxu0 0
        %2183 = vmatmul.mubr.bf16.gmra.mrb[0].mxu0 %v2041
        %v2184 = vpop.f32.mrb[0].mxu0
        %v2185 = vadd.f32 %v2063, %v2184
        %v2186 = vpop.f32.mrb[0].mxu0
        %v2187 = vadd.f32 %v2067, %v2186
        %v2188 = vpop.f32.mrb[0].mxu0
        %v2189 = vpop.f32.mrb[0].mxu0
        %2190 = vdwg.mxu0
        %v2191 = vmax.f32 %v2185, 0.0
        %v2192 = vmax.f32 %v2187, 0.0
        %v2193 = vpack.c.bf16 %v2191, %v2191
        %v2194 = vpack.c.bf16 %v2192, %v2192
        %v2195 = vld [vmem:[#allocation11] sm:$0xf]
        %v2196 = vld [vmem:[#allocation11 + $0x4] sm:$0xf]
        %v2197 = vld [vmem:[#allocation11 + $0x8] sm:$0xf]
        %v2198 = vld [vmem:[#allocation11 + $0xc] sm:$0xf]
        %v2199 = vld [vmem:[#allocation11 + $0x10] sm:$0xf]
        %v2200 = vld [vmem:[#allocation11 + $0x14] sm:$0xf]
        %v2201 = vld [vmem:[#allocation11 + $0x18] sm:$0xf]
        %v2202 = vld [vmem:[#allocation11 + $0x1c] sm:$0xf]
        %v2203 = vld [vmem:[#allocation11 + $0x20] sm:$0xf]
        %v2204 = vld [vmem:[#allocation11 + $0x24] sm:$0xf]
        %v2205 = vld [vmem:[#allocation11 + $0x28] sm:$0xf]
        %v2206 = vld [vmem:[#allocation11 + $0x2c] sm:$0xf]
        %v2207 = vld [vmem:[#allocation11 + $0x30] sm:$0xf]
        %v2208 = vld [vmem:[#allocation11 + $0x34] sm:$0xf]
        %v2209 = vld [vmem:[#allocation11 + $0x38] sm:$0xf]
        %v2210 = vld [vmem:[#allocation11 + $0x3c] sm:$0xf]
        %v2211 = vld [vmem:[#allocation11 + $0x40] sm:$0xf]
        %v2212 = vld [vmem:[#allocation11 + $0x44] sm:$0xf]
        %v2213 = vld [vmem:[#allocation11 + $0x48] sm:$0xf]
        %v2214 = vld [vmem:[#allocation11 + $0x4c] sm:$0xf]
        %v2215 = vld [vmem:[#allocation11 + $0x50] sm:$0xf]
        %v2216 = vld [vmem:[#allocation11 + $0x54] sm:$0xf]
        %v2217 = vld [vmem:[#allocation11 + $0x58] sm:$0xf]
        %v2218 = vld [vmem:[#allocation11 + $0x5c] sm:$0xf]
        %v2219 = vld [vmem:[#allocation11 + $0x60] sm:$0xf]
        %v2220 = vld [vmem:[#allocation11 + $0x64] sm:$0xf]
        %v2221 = vld [vmem:[#allocation11 + $0x68] sm:$0xf]
        %v2222 = vld [vmem:[#allocation11 + $0x6c] sm:$0xf]
        %v2223 = vld [vmem:[#allocation11 + $0x70] sm:$0xf]
        %v2224 = vld [vmem:[#allocation11 + $0x74] sm:$0xf]
        %v2225 = vld [vmem:[#allocation11 + $0x78] sm:$0xf]
        %v2226 = vld [vmem:[#allocation11 + $0x7c] sm:$0xf]
        %v2227 = vld [vmem:[%s13] sm:$0x1]
        %v2229 = vlaneseq
        %v2230 = vshrl.u32 %v2229, 7
        %v2231 = vsub.s32 0, %v2230
        %v2232 = vrot.slane %v2227, %v2231
        %v2266 = vunpack.c.l.b16 %v2195
        %v2267 = vunpack.c.l.b16 %v2196
        %v2268 = vunpack.c.l.b16 %v2197
        %v2269 = vunpack.c.l.b16 %v2198
        %v2270 = vunpack.c.l.b16 %v2199
        %v2271 = vunpack.c.l.b16 %v2200
        %v2272 = vunpack.c.l.b16 %v2201
        %v2273 = vunpack.c.l.b16 %v2202
        %v2274 = vunpack.c.l.b16 %v2203
        %v2275 = vunpack.c.l.b16 %v2204
        %v2276 = vunpack.c.l.b16 %v2205
        %v2277 = vunpack.c.l.b16 %v2206
        %v2278 = vunpack.c.l.b16 %v2207
        %v2279 = vunpack.c.l.b16 %v2208
        %v2280 = vunpack.c.l.b16 %v2209
        %v2281 = vunpack.c.l.b16 %v2210
        %v2282 = vunpack.c.l.b16 %v2211
        %v2283 = vunpack.c.l.b16 %v2212
        %v2284 = vunpack.c.l.b16 %v2213
        %v2285 = vunpack.c.l.b16 %v2214
        %v2286 = vunpack.c.l.b16 %v2215
        %v2287 = vunpack.c.l.b16 %v2216
        %v2288 = vunpack.c.l.b16 %v2217
        %v2289 = vunpack.c.l.b16 %v2218
        %v2290 = vunpack.c.l.b16 %v2219
        %v2291 = vunpack.c.l.b16 %v2220
        %v2292 = vunpack.c.l.b16 %v2221
        %v2293 = vunpack.c.l.b16 %v2222
        %v2294 = vunpack.c.l.b16 %v2223
        %v2295 = vunpack.c.l.b16 %v2224
        %v2296 = vunpack.c.l.b16 %v2225
        %v2297 = vunpack.c.l.b16 %v2226
        %v2298 = vpack.c.b16 %v2267, %v2266
        %v2299 = vpack.c.b16 %v2269, %v2268
        %v2300 = vpack.c.b16 %v2271, %v2270
        %v2301 = vpack.c.b16 %v2273, %v2272
        %v2302 = vpack.c.b16 %v2275, %v2274
        %v2303 = vpack.c.b16 %v2277, %v2276
        %v2304 = vpack.c.b16 %v2279, %v2278
        %v2305 = vpack.c.b16 %v2281, %v2280
        %v2306 = vpack.c.b16 %v2283, %v2282
        %v2307 = vpack.c.b16 %v2285, %v2284
        %v2308 = vpack.c.b16 %v2287, %v2286
        %v2309 = vpack.c.b16 %v2289, %v2288
        %v2310 = vpack.c.b16 %v2291, %v2290
        %v2311 = vpack.c.b16 %v2293, %v2292
        %v2312 = vpack.c.b16 %v2295, %v2294
        %v2313 = vpack.c.b16 %v2297, %v2296
        %2330 = vmatprep.subr.bf16.mxu0 0
        %2331 = vmatpush1.bf16.msra.mxu0 %v2298
        %2332 = vmatprep.subr.bf16.mxu0 0
        %2333 = vmatpush1.bf16.msra.mxu0 %v2299
        %2334 = vmatprep.subr.bf16.mxu0 0
        %2335 = vmatpush1.bf16.msra.mxu0 %v2300
        %2336 = vmatprep.subr.bf16.mxu0 0
        %2337 = vmatpush1.bf16.msra.mxu0 %v2301
        %2338 = vmatprep.subr.bf16.mxu0 0
        %2339 = vmatpush1.bf16.msra.mxu0 %v2302
        %2340 = vmatprep.subr.bf16.mxu0 0
        %2341 = vmatpush1.bf16.msra.mxu0 %v2303
        %2342 = vmatprep.subr.bf16.mxu0 0
        %2343 = vmatpush1.bf16.msra.mxu0 %v2304
        %2344 = vmatprep.subr.bf16.mxu0 0
        %2345 = vmatpush1.bf16.msra.mxu0 %v2305
        %2346 = vmatprep.subr.bf16.mxu0 0
        %2347 = vmatpush1.bf16.msra.mxu0 %v2306
        %2348 = vmatprep.subr.bf16.mxu0 0
        %2349 = vmatpush1.bf16.msra.mxu0 %v2307
        %2350 = vmatprep.subr.bf16.mxu0 0
        %2351 = vmatpush1.bf16.msra.mxu0 %v2308
        %2352 = vmatprep.subr.bf16.mxu0 0
        %2353 = vmatpush1.bf16.msra.mxu0 %v2309
        %2354 = vmatprep.subr.bf16.mxu0 0
        %2355 = vmatpush1.bf16.msra.mxu0 %v2310
        %2356 = vmatprep.subr.bf16.mxu0 0
        %2357 = vmatpush1.bf16.msra.mxu0 %v2311
        %2358 = vmatprep.subr.bf16.mxu0 0
        %2359 = vmatpush1.bf16.msra.mxu0 %v2312
        %2360 = vmatprep.subr.bf16.mxu0 0
        %2361 = vmatpush1.bf16.msra.mxu0 %v2313
        %2362 = vmatprep.mubr.bf16.mxu0 %v2194
        %2363 = vmatmul.mubr.bf16.gmra.mrb[0].mxu0 %v2193
        %v2364 = vpop.f32.mrb[0].mxu0
        %v2365 = vadd.f32 %v2232, %v2364
        %v2366 = vpop.f32.mrb[0].mxu0
        %v2367 = vpop.f32.mrb[0].mxu0
        %v2368 = vpop.f32.mrb[0].mxu0
        %2369 = vdwg.mxu0
        %v2370 = vadd.f32 %v2006, %v2365
        %2371 = vst [vmem:[%s564] sm:$0xff] %v2370
        %s2372 = sand.u32 %s346, 1
        %s2373 = scalar_lea.sflag [#allocation4], %s2372
        %s2374 = sand.u32 %s346, 1
        %s2375 = smul.addr %s2374, 8
        %s2376 = scalar_lea.vmem [#allocation13], %s2375
        // Predicated region
        $region101: #{tpu_custom_call.1} parent=75 // pred_check
          %p2377 = pneg %p356
        $region102: #{tpu_custom_call.1} parent=75 // pred_check_branch
          %2379 = sbr.rel (%p2377) target = $region104
        $region103: #{tpu_custom_call.1} parent=75 // pred_region
          %s2381 = ssub.s32 128, 128
          %2382 = vsyncadd %s2373, %s2381
          %s2383 = smul.addr %s34, 128
          %s2384 = scalar_lea.hbm %s14, %s2383
          %s2386 = sshll.u32 %s2376, 4
          %s2387 = int_to_ptr.vmem [resolvable:$true] %s2386
          %2389 = dma.vmem_to_hbm [thread:$0]  %s2387, 128, %s2384, %s2373
        $region104: #{tpu_custom_call.1} parent=75 // pred_fallthru
          _
      $region76: #{tpu_custom_call.1} parent=5 // pred_fallthru
        _
      %p2390 = scmp.le.s32.totalorder 2, %s29
      // Predicated region
      $region105: #{tpu_custom_call.1} parent=5 // pred_check
        %p2391 = pneg %p2390
      $region106: #{tpu_custom_call.1} parent=5 // pred_check_branch
        %2393 = sbr.rel (%p2391) target = $region108
      $region107: #{tpu_custom_call.1} parent=5 // pred_region
        %s2394 = ssub.s32 %s29, 2
        // Predicated region
        $region109: #{tpu_custom_call.1} parent=107 // pred_check
          %p2395 = pneg %p362
        $region110: #{tpu_custom_call.1} parent=107 // pred_check_branch
          %2397 = sbr.rel (%p2395) target = $region112
        $region111: #{tpu_custom_call.1} parent=107 // pred_region
          %s2398 = sand.u32 %s347, 1
          %s2399 = scalar_lea.sflag [#allocation4], %s2398
          %s2400 = sand.u32 %s347, 1
          %s2401 = smul.addr %s2400, 8
          %s2402 = scalar_lea.vmem [#allocation13], %s2401
          %2403 = dma.done %s2399, 128
        $region112: #{tpu_custom_call.1} parent=107 // pred_fallthru
          _
      $region108: #{tpu_custom_call.1} parent=5 // pred_fallthru
        _
    $region6: #{tpu_custom_call.1} parent=1 // loop_footer
      %s33 = sadd.s32 1, %s29
    $region7: #{tpu_custom_call.1} parent=1 // loop_footer_branch
      %28 = sbr.rel target = $region3
    $region8: #{tpu_custom_call.1} parent=1 // loop_exit
      _
    %2404 = vsyncpa [#allocation3], 1
    %s2405 = scalar_lea.sflag [#allocation3], 1
    %2406 = vsyncpa %s2405, 1
    %2407 = vsyncpa [#allocation6], 1
    %2408 = vsyncpa [#allocation9], 1
    %2409 = vsyncpa [#allocation12], 1
    %2410 = vsyncpa [#allocation4], 1
    %s2411 = scalar_lea.sflag [#allocation4], 1
    %2412 = vsyncpa %s2411, 1

</llo_original>
